<compile_context>
chip_gen: v7x
topology: tpu7x:2x2x1
jax: 0.10.0
libtpu: 0.0.40
codegen_flags: <defaults>
</compile_context>

<pallas_src>
import jax
import jax.numpy as jnp
from jax.experimental import pallas as pl
from jax.experimental.pallas import tpu as pltpu


def _round_up(x, m):
    return (x + m - 1) // m * m


# --------------------------------------------------------------------------
# Kernel
# --------------------------------------------------------------------------
def clip_image_encoder_kernel(
    x_ref,      # (tm, tk)          bf16  flattened image tile (Normalize folded away)
    wenc_ref,   # (tk, D_pad)       bf16  folded visual-encoder weight tile
    benc_ref,   # (1, D_pad)        f32   folded encoder bias
    w1_ref,     # (D_pad, OC_pad)   bf16  mlp[0] weight (transposed vs torch)
    b1_ref,     # (1, OC_pad)       f32
    w2_ref,     # (OC_pad, OC_pad)  bf16  mlp[3] weight (transposed vs torch)
    b2_ref,     # (1, OC_pad)       f32
    out_ref,    # (tm, OC_pad)      f32
    acc_ref,    # (tm, D_pad)       f32   scratch accumulator
):
    k = pl.program_id(1)

    @pl.when(k == 0)
    def _():
        # Accumulator starts at the (folded) encoder bias -> no epilogue add.
        acc_ref[...] = jnp.broadcast_to(benc_ref[...], acc_ref.shape)

    # ---- encoder GEMM partial sum: bf16 inputs, f32 MXU accumulation ----
    acc_ref[...] += jnp.dot(
        x_ref[...], wenc_ref[...], preferred_element_type=jnp.float32
    )

    @pl.when(k == pl.num_programs(1) - 1)
    def _():
        # ---- clip_model.encode_image(Normalize(x)).float() (synthetic linear) ----
        feat = acc_ref[...]                                  # (tm, D_pad) f32

        # ---- F.normalize(dim=1, eps=1e-12): rsqrt on the EUP, no VPU divide ----
        sq = jnp.sum(feat * feat, axis=1, keepdims=True)
        inv_norm = jax.lax.rsqrt(jnp.maximum(sq, 1e-24))     # == 1 / max(||f||, 1e-12)
        normed = (feat * inv_norm).astype(jnp.bfloat16)      # bf16 for the MXU

        # ---- mlp: Linear -> ReLU -> Dropout(eval: identity) -> Linear ----
        h = jnp.dot(normed, w1_ref[...], preferred_element_type=jnp.float32)
        h = jnp.maximum(h + b1_ref[...], 0.0).astype(jnp.bfloat16)
        out = jnp.dot(h, w2_ref[...], preferred_element_type=jnp.float32)
        out_ref[...] = (out + b2_ref[...]).astype(out_ref.dtype)


# --------------------------------------------------------------------------
# VMEM budgeting / tile selection
# --------------------------------------------------------------------------
def _vmem_capacity_bytes():
    try:
        info = pltpu.get_tpu_info()
        for attr in ("vmem_capacity_bytes", "vmem_size_bytes", "vmem_bytes"):
            v = getattr(info, attr, None)
            if v:
                return int(v)
    except Exception:
        pass
    return 64 << 20  # conservative default (v7x per-TC VMEM)


def _vmem_need(tm, tk, D_pad, OC_pad, param_bufs):
    return (
        2 * tm * tk * 2                         # x tiles (bf16, double-buffered)
        + 2 * tk * D_pad * 2                    # w_enc tiles (bf16, double-buffered)
        + param_bufs * (D_pad * 4               # b_enc (f32)
                        + D_pad * OC_pad * 2    # w1 (bf16)
                        + OC_pad * 4            # b1 (f32)
                        + OC_pad * OC_pad * 2   # w2 (bf16)
                        + OC_pad * 4)           # b2 (f32)
        + tm * D_pad * 4                        # f32 accumulator scratch
        + 2 * tm * OC_pad * 4                   # output block
    )


def _pick_tiles(B, F, D_pad, OC_pad, vmem_budget, tm, tk):
    # ---- tk: reduction tile along the flattened-feature axis ----
    if tk is None:
        # 128-MiB parts (v5e/v6e) tolerate bigger K tiles than 64-MiB v7x.
        tk_cap = 8192 if vmem_budget >= (80 << 20) else 4096
        tk = min(tk_cap, _round_up(F, 128))
        # Keep the double-buffered w_enc stream under ~40% of the budget.
        while tk > 256 and 2 * tk * D_pad * 2 > 0.4 * vmem_budget:
            tk = max(256, _round_up(tk // 2, 128))
    else:
        tk = min(_round_up(tk, 128), _round_up(F, 128))

    # ---- tm: row tile. Bigger tm => fewer re-streams of the F x D weight. ----
    if tm is None:
        if B <= 128:
            tm = _round_up(max(B, 16), 16)        # avoid over-padding tiny batches
        else:
            # As large as VMEM permits, up to 1024 rows. (On v7x, if this makes
            # B_pad // tm == 1 the second TensorCore idles on the parallel axis;
            # benchmark tm = B_pad // 2 for compute-bound configs.)
            tm = min(1024, _round_up(B, 128))
            while tm > 128 and _vmem_need(tm, tk, D_pad, OC_pad, 2) > vmem_budget:
                tm -= 128
            while (tk > 256
                   and _vmem_need(tm, tk, D_pad, OC_pad, 2) > vmem_budget):
                tk = max(256, _round_up(tk // 2, 128))
    else:
        tm = _round_up(tm, 16)

    return tm, tk


# --------------------------------------------------------------------------
# Wrapper
# --------------------------------------------------------------------------
def clip_image_encoder(x_nchw, params, *, tm=None, tk=None):
    """x_nchw: (B, C, H, W) float32. Returns (B, output_channel) float32."""
    B, C, H, W = x_nchw.shape
    F = C * H * W
    x_flat = x_nchw.astype(jnp.float32).reshape(B, F)

    # ---- fold Normalize((mean),(std)) into the encoder weights (exact algebra) ----
    inv_std = 1.0 / params["clip_std"].astype(jnp.float32)                  # (C,)
    inv_std_flat = jnp.repeat(inv_std, H * W).reshape(F, 1)                 # (F, 1)
    mean_flat = jnp.repeat(
        params["clip_mean"].astype(jnp.float32), H * W).reshape(1, F)       # (1, F)

    w_fold = params["w_enc"].astype(jnp.float32) * inv_std_flat             # (F, D)
    b_fold = params["b_enc"].astype(jnp.float32).reshape(1, -1) - mean_flat @ w_fold

    D = w_fold.shape[1]
    OC = params["w2"].shape[1]

    # ---- pad to lane/sublane multiples (zero padding is exact) ----
    D_pad = _round_up(D, 128)
    OC_pad = _round_up(OC, 128)

    vmem_phys = _vmem_capacity_bytes()
    vmem_budget = (3 * vmem_phys) // 4          # ~96 MiB on v5e/v6e, ~48 MiB on v7x

    tm, tk = _pick_tiles(B, F, D_pad, OC_pad, vmem_budget, tm, tk)
    B_pad = _round_up(B, tm)
    F_pad = _round_up(F, tk)

    x_p = jnp.pad(x_flat, ((0, B_pad - B), (0, F_pad - F))).astype(jnp.bfloat16)
    w_p = jnp.pad(w_fold, ((0, F_pad - F), (0, D_pad - D))).astype(jnp.bfloat16)
    b_enc_p = jnp.pad(b_fold, ((0, 0), (0, D_pad - D)))
    w1_p = jnp.pad(params["w1"].astype(jnp.float32),
                   ((0, D_pad - D), (0, OC_pad - OC))).astype(jnp.bfloat16)
    b1_p = jnp.pad(params["b1"].astype(jnp.float32).reshape(1, -1),
                   ((0, 0), (0, OC_pad - OC)))
    w2_p = jnp.pad(params["w2"].astype(jnp.float32),
                   ((0, OC_pad - OC), (0, OC_pad - OC))).astype(jnp.bfloat16)
    b2_p = jnp.pad(params["b2"].astype(jnp.float32).reshape(1, -1),
                   ((0, 0), (0, OC_pad - OC)))

    grid = (B_pad // tm, F_pad // tk)

    # VMEM limit: always >= the buffers we actually need (+ headroom), clamped
    # to the per-generation usable budget (never below need).
    need = _vmem_need(tm, tk, D_pad, OC_pad, 2)   # conservative: double-buffered params
    vmem_limit = int(max(min(vmem_budget, max(2 * need, 32 << 20)),
                         need + (4 << 20)))

    def _build(single_buffer_params):
        if single_buffer_params:
            # Constant index_map params never re-DMA; one buffer is enough.
            def param_spec(shape):
                return pl.BlockSpec(shape, lambda i, k: (0, 0),
                                    pipeline_mode=pl.Buffered(1))
        else:
            def param_spec(shape):
                return pl.BlockSpec(shape, lambda i, k: (0, 0))

        in_specs = [
            pl.BlockSpec((tm, tk), lambda i, k: (i, k)),           # x
            pl.BlockSpec((tk, D_pad), lambda i, k: (k, 0)),        # w_enc (folded)
            param_spec((1, D_pad)),                                # b_enc (folded)
            param_spec((D_pad, OC_pad)),                           # w1
            param_spec((1, OC_pad)),                               # b1
            param_spec((OC_pad, OC_pad)),                          # w2
            param_spec((1, OC_pad)),                               # b2
        ]
        return pl.pallas_call(
            clip_image_encoder_kernel,
            out_shape=jax.ShapeDtypeStruct((B_pad, OC_pad), jnp.float32),
            grid_spec=pltpu.PrefetchScalarGridSpec(
                num_scalar_prefetch=0,
                grid=grid,
                in_specs=in_specs,
                out_specs=pl.BlockSpec((tm, OC_pad), lambda i, k: (i, 0)),
                scratch_shapes=[pltpu.VMEM((tm, D_pad), jnp.float32)],
            ),
            compiler_params=pltpu.CompilerParams(
                dimension_semantics=("parallel", "arbitrary"),
                vmem_limit_bytes=vmem_limit,
            ),
        )

    args = (x_p, w_p, b_enc_p, w1_p, b1_p, w2_p, b2_p)
    try:
        out_padded = _build(single_buffer_params=True)(*args)
    except Exception:
        # Older Pallas without Buffered(1) support: fall back to default buffering.
        out_padded = _build(single_buffer_params=False)(*args)

    return out_padded[:B, :OC]


# --------------------------------------------------------------------------
# Pure-JAX reference + params
# --------------------------------------------------------------------------
def clip_image_encoder_ref(x_nchw, params):
    """Pure-JAX f32 reference (un-folded, un-padded) for validation."""
    B, C, H, W = x_nchw.shape
    F = C * H * W
    hp = jax.lax.Precision.HIGHEST
    x = x_nchw.astype(jnp.float32).reshape(B, F)
    mean = jnp.repeat(params["clip_mean"], H * W).reshape(1, F)
    std = jnp.repeat(params["clip_std"], H * W).reshape(1, F)
    xn = (x - mean) / std
    feat = jnp.dot(xn, params["w_enc"], precision=hp) + params["b_enc"]
    norm = jnp.maximum(jnp.sqrt(jnp.sum(feat * feat, axis=1, keepdims=True)), 1e-12)
    normed = feat / norm
    h = jnp.maximum(jnp.dot(normed, params["w1"], precision=hp) + params["b1"], 0.0)
    return jnp.dot(h, params["w2"], precision=hp) + params["b2"]


def init_params(key, C, H, W, clip_output_dim, output_channel):
    F = C * H * W
    k = jax.random.split(key, 6)
    scale_enc = 1.0 / jnp.sqrt(F)
    scale_1 = 1.0 / jnp.sqrt(clip_output_dim)
    scale_2 = 1.0 / jnp.sqrt(output_channel)
    return {
        "clip_mean": jnp.array([0.48145466, 0.4578275, 0.40821073][:C], jnp.float32),
        "clip_std": jnp.array([0.26862954, 0.26130258, 0.27577711][:C], jnp.float32),
        "w_enc": scale_enc * jax.random.normal(k[0], (F, clip_output_dim), jnp.float32),
        "b_enc": scale_enc * jax.random.normal(k[1], (1, clip_output_dim), jnp.float32),
        "w1": scale_1 * jax.random.normal(k[2], (clip_output_dim, output_channel), jnp.float32),
        "b1": scale_1 * jax.random.normal(k[3], (1, output_channel), jnp.float32),
        "w2": scale_2 * jax.random.normal(k[4], (output_channel, output_channel), jnp.float32),
        "b2": scale_2 * jax.random.normal(k[5], (1, output_channel), jnp.float32),
    }


if __name__ == "__main__":
    key = jax.random.PRNGKey(0)

    def run_case(case_id, B, C, H, W, D, OC, **tiles):
        kx, kp = jax.random.split(jax.random.fold_in(key, case_id))
        x = jax.random.uniform(kx, (B, C, H, W), jnp.float32)   # image in [0, 1]
        params = init_params(kp, C, H, W, D, OC)

        out = clip_image_encoder(x, params, **tiles)
        jax.block_until_ready(out)

        # contract checks
        assert out.shape == (B, OC) and out.dtype == jnp.float32
        assert bool(jnp.all(jnp.isfinite(out)))

        # numerical check vs. f32 reference (folded Normalize + bf16 streaming)
        ref = clip_image_encoder_ref(x, params)
        max_err = float(jnp.max(jnp.abs(out - ref)))
        assert max_err < 5e-2, f"case {case_id}: max abs err {max_err}"

    # 1) small default-tile case (CLIP images have 3 channels)
    run_case(0, B=2, C=3, H=16, W=16, D=32, OC=32)
    # 2) multi-block grid: forces i- and k-tiling, non-128-multiple D/OC padding,
    #    per-row-tile bias init and last-k epilogue across several k steps.
    run_case(1, B=48, C=3, H=16, W=16, D=96, OC=48, tm=16, tk=256)

    print("KERNEL_OK")
</pallas_src>

<mosaic_0001>
module attributes {stable_mosaic.version = 11 : i64} {
  func.func @clip_image_encoder_kernel(%arg0: i32, %arg1: i32, %arg2: memref<16x768xbf16, #tpu.memory_space<vmem>>, %arg3: memref<768x128xbf16, #tpu.memory_space<vmem>>, %arg4: memref<1x128xf32, #tpu.memory_space<vmem>>, %arg5: memref<128x128xbf16, #tpu.memory_space<vmem>>, %arg6: memref<1x128xf32, #tpu.memory_space<vmem>>, %arg7: memref<128x128xbf16, #tpu.memory_space<vmem>>, %arg8: memref<1x128xf32, #tpu.memory_space<vmem>>, %arg9: memref<16x128xf32, #tpu.memory_space<vmem>>, %arg10: memref<16x128xf32, #tpu.memory_space<vmem>>) attributes {dimension_semantics = [#tpu.dimension_semantics<parallel>, #tpu.dimension_semantics<arbitrary>], iteration_bounds = array<i64: 1, 1>, scalar_prefetch = 0 : i64, scratch_operands = 1 : i64, tpu.core_type = #tpu.core_type<tc>, window_params = [{transform_indices = @transform_0, window_bounds = array<i64: 16, 768>}, {transform_indices = @transform_1, window_bounds = array<i64: 768, 128>}, {pipeline_mode = #tpu.pipeline_mode<synchronous>, transform_indices = @transform_2, window_bounds = array<i64: 1, 128>}, {pipeline_mode = #tpu.pipeline_mode<synchronous>, transform_indices = @transform_3, window_bounds = array<i64: 128, 128>}, {pipeline_mode = #tpu.pipeline_mode<synchronous>, transform_indices = @transform_4, window_bounds = array<i64: 1, 128>}, {pipeline_mode = #tpu.pipeline_mode<synchronous>, transform_indices = @transform_5, window_bounds = array<i64: 128, 128>}, {pipeline_mode = #tpu.pipeline_mode<synchronous>, transform_indices = @transform_6, window_bounds = array<i64: 1, 128>}, {transform_indices = @transform_7, window_bounds = array<i64: 16, 128>}]} {
    %c0_i32 = arith.constant 0 : i32
    %0 = arith.cmpi eq, %arg1, %c0_i32 : i32
    %1 = arith.extui %0 : i1 to i32
    %c0_i32_0 = arith.constant 0 : i32
    %2 = arith.cmpi ne, %1, %c0_i32_0 : i32
    scf.if %2 {
      %c0_10 = arith.constant 0 : index
      %c0_11 = arith.constant 0 : index
      %12 = vector.load %arg4[%c0_10, %c0_11] : memref<1x128xf32, #tpu.memory_space<vmem>>, vector<1x128xf32>
      %13 = vector.shape_cast %12 : vector<1x128xf32> to vector<1x128xf32>
      %14 = vector.broadcast %13 : vector<1x128xf32> to vector<16x128xf32>
      %c0_12 = arith.constant 0 : index
      %c0_13 = arith.constant 0 : index
      %15 = vector.load %arg10[%c0_12, %c0_13] : memref<16x128xf32, #tpu.memory_space<vmem>>, vector<16x128xf32>
      tpu.vector_store %arg10[%c0_12, %c0_13], %14 {strides = array<i32>} : memref<16x128xf32, #tpu.memory_space<vmem>>, vector<16x128xf32>,
    } else {
    }
    %c0 = arith.constant 0 : index
    %c0_1 = arith.constant 0 : index
    %3 = vector.load %arg10[%c0, %c0_1] : memref<16x128xf32, #tpu.memory_space<vmem>>, vector<16x128xf32>
    %c0_2 = arith.constant 0 : index
    %c0_3 = arith.constant 0 : index
    %4 = vector.load %arg2[%c0_2, %c0_3] : memref<16x768xbf16, #tpu.memory_space<vmem>>, vector<16x768xbf16>
    %c0_4 = arith.constant 0 : index
    %c0_5 = arith.constant 0 : index
    %5 = vector.load %arg3[%c0_4, %c0_5] : memref<768x128xbf16, #tpu.memory_space<vmem>>, vector<768x128xbf16>
    %cst = arith.constant dense<0.000000e+00> : vector<16x128xf32>
    %6 = tpu.matmul %4, %5, %cst {dimension_numbers = #tpu.dot_dimension_numbers<[1], [0], [0], [1], [0, 0, 1, 1], [], []>} : vector<16x768xbf16>, vector<768x128xbf16>, vector<16x128xf32> -> vector<16x128xf32>
    %7 = arith.addf %3, %6 : vector<16x128xf32>
    %c0_6 = arith.constant 0 : index
    %c0_7 = arith.constant 0 : index
    %8 = vector.load %arg10[%c0_6, %c0_7] : memref<16x128xf32, #tpu.memory_space<vmem>>, vector<16x128xf32>
    tpu.vector_store %arg10[%c0_6, %c0_7], %7 {strides = array<i32>} : memref<16x128xf32, #tpu.memory_space<vmem>>, vector<16x128xf32>,
    %c0_i32_8 = arith.constant 0 : i32
    %9 = arith.cmpi eq, %arg1, %c0_i32_8 : i32
    %10 = arith.extui %9 : i1 to i32
    %c0_i32_9 = arith.constant 0 : i32
    %11 = arith.cmpi ne, %10, %c0_i32_9 : i32
    scf.if %11 {
      %c0_10 = arith.constant 0 : index
      %c0_11 = arith.constant 0 : index
      %12 = vector.load %arg10[%c0_10, %c0_11] : memref<16x128xf32, #tpu.memory_space<vmem>>, vector<16x128xf32>
      %13 = arith.mulf %12, %12 : vector<16x128xf32>
      %cst_12 = arith.constant dense<0.000000e+00> : vector<16xf32>
      %14 = vector.multi_reduction <add>, %13, %cst_12 [1] : vector<16x128xf32> to vector<16xf32>
      %15 = vector.shape_cast %14 : vector<16xf32> to vector<16x1xf32>
      %cst_13 = arith.constant 1.000000e-24 : f32
      %16 = vector.broadcast %cst_13 : f32 to vector<16x1xf32>
      %17 = arith.maximumf %15, %16 : vector<16x1xf32>
      %18 = math.rsqrt %17 : vector<16x1xf32>
      %19 = vector.broadcast %18 : vector<16x1xf32> to vector<16x128xf32>
      %20 = arith.mulf %12, %19 : vector<16x128xf32>
      %21 = arith.truncf %20 : vector<16x128xf32> to vector<16x128xbf16>
      %c0_14 = arith.constant 0 : index
      %c0_15 = arith.constant 0 : index
      %22 = vector.load %arg5[%c0_14, %c0_15] : memref<128x128xbf16, #tpu.memory_space<vmem>>, vector<128x128xbf16>
      %cst_16 = arith.constant dense<0.000000e+00> : vector<16x128xf32>
      %23 = tpu.matmul %21, %22, %cst_16 {dimension_numbers = #tpu.dot_dimension_numbers<[1], [0], [0], [1], [0, 0, 1, 1], [], []>} : vector<16x128xbf16>, vector<128x128xbf16>, vector<16x128xf32> -> vector<16x128xf32>
      %c0_17 = arith.constant 0 : index
      %c0_18 = arith.constant 0 : index
      %24 = vector.load %arg6[%c0_17, %c0_18] : memref<1x128xf32, #tpu.memory_space<vmem>>, vector<1x128xf32>
      %25 = vector.broadcast %24 : vector<1x128xf32> to vector<16x128xf32>
      %26 = arith.addf %23, %25 : vector<16x128xf32>
      %cst_19 = arith.constant 0.000000e+00 : f32
      %27 = vector.broadcast %cst_19 : f32 to vector<16x128xf32>
      %28 = arith.maximumf %26, %27 : vector<16x128xf32>
      %29 = arith.truncf %28 : vector<16x128xf32> to vector<16x128xbf16>
      %c0_20 = arith.constant 0 : index
      %c0_21 = arith.constant 0 : index
      %30 = vector.load %arg7[%c0_20, %c0_21] : memref<128x128xbf16, #tpu.memory_space<vmem>>, vector<128x128xbf16>
      %cst_22 = arith.constant dense<0.000000e+00> : vector<16x128xf32>
      %31 = tpu.matmul %29, %30, %cst_22 {dimension_numbers = #tpu.dot_dimension_numbers<[1], [0], [0], [1], [0, 0, 1, 1], [], []>} : vector<16x128xbf16>, vector<128x128xbf16>, vector<16x128xf32> -> vector<16x128xf32>
      %c0_23 = arith.constant 0 : index
      %c0_24 = arith.constant 0 : index
      %32 = vector.load %arg8[%c0_23, %c0_24] : memref<1x128xf32, #tpu.memory_space<vmem>>, vector<1x128xf32>
      %33 = vector.broadcast %32 : vector<1x128xf32> to vector<16x128xf32>
      %34 = arith.addf %31, %33 : vector<16x128xf32>
      %c0_25 = arith.constant 0 : index
      %c0_26 = arith.constant 0 : index
      %35 = vector.load %arg9[%c0_25, %c0_26] : memref<16x128xf32, #tpu.memory_space<vmem>>, vector<16x128xf32>
      tpu.vector_store %arg9[%c0_25, %c0_26], %34 {strides = array<i32>} : memref<16x128xf32, #tpu.memory_space<vmem>>, vector<16x128xf32>,
    } else {
    }
    return
  }
  func.func @transform_0(%arg0: i32, %arg1: i32) -> (i32, i32) {
    %c0_i32 = arith.constant 0 : i32
    return %arg0, %arg1 : i32, i32
  }
  func.func @transform_1(%arg0: i32, %arg1: i32) -> (i32, i32) {
    %c0_i32 = arith.constant 0 : i32
    %c0_i32_0 = arith.constant 0 : i32
    return %arg1, %c0_i32 : i32, i32
  }
  func.func @transform_2(%arg0: i32, %arg1: i32) -> (i32, i32) {
    %c0_i32 = arith.constant 0 : i32
    %c0_i32_0 = arith.constant 0 : i32
    %c0_i32_1 = arith.constant 0 : i32
    return %c0_i32, %c0_i32_0 : i32, i32
  }
  func.func @transform_3(%arg0: i32, %arg1: i32) -> (i32, i32) {
    %c0_i32 = arith.constant 0 : i32
    %c0_i32_0 = arith.constant 0 : i32
    %c0_i32_1 = arith.constant 0 : i32
    return %c0_i32, %c0_i32_0 : i32, i32
  }
  func.func @transform_4(%arg0: i32, %arg1: i32) -> (i32, i32) {
    %c0_i32 = arith.constant 0 : i32
    %c0_i32_0 = arith.constant 0 : i32
    %c0_i32_1 = arith.constant 0 : i32
    return %c0_i32, %c0_i32_0 : i32, i32
  }
  func.func @transform_5(%arg0: i32, %arg1: i32) -> (i32, i32) {
    %c0_i32 = arith.constant 0 : i32
    %c0_i32_0 = arith.constant 0 : i32
    %c0_i32_1 = arith.constant 0 : i32
    return %c0_i32, %c0_i32_0 : i32, i32
  }
  func.func @transform_6(%arg0: i32, %arg1: i32) -> (i32, i32) {
    %c0_i32 = arith.constant 0 : i32
    %c0_i32_0 = arith.constant 0 : i32
    %c0_i32_1 = arith.constant 0 : i32
    return %c0_i32, %c0_i32_0 : i32, i32
  }
  func.func @transform_7(%arg0: i32, %arg1: i32) -> (i32, i32) {
    %c0_i32 = arith.constant 0 : i32
    %c0_i32_0 = arith.constant 0 : i32
    return %arg0, %c0_i32 : i32, i32
  }
}

module attributes {stable_mosaic.version = 11 : i64} {
  func.func @clip_image_encoder_kernel(%arg0: i32, %arg1: i32, %arg2: memref<16x768xbf16, #tpu.memory_space<vmem>>, %arg3: memref<768x128xbf16, #tpu.memory_space<vmem>>, %arg4: memref<1x128xf32, #tpu.memory_space<vmem>>, %arg5: memref<128x128xbf16, #tpu.memory_space<vmem>>, %arg6: memref<1x128xf32, #tpu.memory_space<vmem>>, %arg7: memref<128x128xbf16, #tpu.memory_space<vmem>>, %arg8: memref<1x128xf32, #tpu.memory_space<vmem>>, %arg9: memref<16x128xf32, #tpu.memory_space<vmem>>, %arg10: memref<16x128xf32, #tpu.memory_space<vmem>>) attributes {dimension_semantics = [#tpu.dimension_semantics<parallel>, #tpu.dimension_semantics<arbitrary>], iteration_bounds = array<i64: 1, 1>, scalar_prefetch = 0 : i64, scratch_operands = 1 : i64, tpu.core_type = #tpu.core_type<tc>, window_params = [{transform_indices = @transform_0, window_bounds = array<i64: 16, 768>}, {transform_indices = @transform_1, window_bounds = array<i64: 768, 128>}, {pipeline_mode = #tpu.pipeline_mode<synchronous>, transform_indices = @transform_2, window_bounds = array<i64: 1, 128>}, {pipeline_mode = #tpu.pipeline_mode<synchronous>, transform_indices = @transform_3, window_bounds = array<i64: 128, 128>}, {pipeline_mode = #tpu.pipeline_mode<synchronous>, transform_indices = @transform_4, window_bounds = array<i64: 1, 128>}, {pipeline_mode = #tpu.pipeline_mode<synchronous>, transform_indices = @transform_5, window_bounds = array<i64: 128, 128>}, {pipeline_mode = #tpu.pipeline_mode<synchronous>, transform_indices = @transform_6, window_bounds = array<i64: 1, 128>}, {transform_indices = @transform_7, window_bounds = array<i64: 16, 128>}]} {
    %c0_i32 = arith.constant 0 : i32
    %0 = arith.cmpi eq, %arg1, %c0_i32 : i32
    %1 = arith.extui %0 : i1 to i32
    %c0_i32_0 = arith.constant 0 : i32
    %2 = arith.cmpi ne, %1, %c0_i32_0 : i32
    scf.if %2 {
      %c0_10 = arith.constant 0 : index
      %c0_11 = arith.constant 0 : index
      %12 = vector.load %arg4[%c0_10, %c0_11] : memref<1x128xf32, #tpu.memory_space<vmem>>, vector<1x128xf32>
      %13 = vector.shape_cast %12 : vector<1x128xf32> to vector<1x128xf32>
      %14 = vector.broadcast %13 : vector<1x128xf32> to vector<16x128xf32>
      %c0_12 = arith.constant 0 : index
      %c0_13 = arith.constant 0 : index
      %15 = vector.load %arg10[%c0_12, %c0_13] : memref<16x128xf32, #tpu.memory_space<vmem>>, vector<16x128xf32>
      tpu.vector_store %arg10[%c0_12, %c0_13], %14 {strides = array<i32>} : memref<16x128xf32, #tpu.memory_space<vmem>>, vector<16x128xf32>,
    } else {
    }
    %c0 = arith.constant 0 : index
    %c0_1 = arith.constant 0 : index
    %3 = vector.load %arg10[%c0, %c0_1] : memref<16x128xf32, #tpu.memory_space<vmem>>, vector<16x128xf32>
    %c0_2 = arith.constant 0 : index
    %c0_3 = arith.constant 0 : index
    %4 = vector.load %arg2[%c0_2, %c0_3] : memref<16x768xbf16, #tpu.memory_space<vmem>>, vector<16x768xbf16>
    %c0_4 = arith.constant 0 : index
    %c0_5 = arith.constant 0 : index
    %5 = vector.load %arg3[%c0_4, %c0_5] : memref<768x128xbf16, #tpu.memory_space<vmem>>, vector<768x128xbf16>
    %cst = arith.constant dense<0.000000e+00> : vector<16x128xf32>
    %6 = tpu.matmul %4, %5, %cst {dimension_numbers = #tpu.dot_dimension_numbers<[1], [0], [0], [1], [0, 0, 1, 1], [], []>} : vector<16x768xbf16>, vector<768x128xbf16>, vector<16x128xf32> -> vector<16x128xf32>
    %7 = arith.addf %3, %6 : vector<16x128xf32>
    %c0_6 = arith.constant 0 : index
    %c0_7 = arith.constant 0 : index
    %8 = vector.load %arg10[%c0_6, %c0_7] : memref<16x128xf32, #tpu.memory_space<vmem>>, vector<16x128xf32>
    tpu.vector_store %arg10[%c0_6, %c0_7], %7 {strides = array<i32>} : memref<16x128xf32, #tpu.memory_space<vmem>>, vector<16x128xf32>,
    %c0_i32_8 = arith.constant 0 : i32
    %9 = arith.cmpi eq, %arg1, %c0_i32_8 : i32
    %10 = arith.extui %9 : i1 to i32
    %c0_i32_9 = arith.constant 0 : i32
    %11 = arith.cmpi ne, %10, %c0_i32_9 : i32
    scf.if %11 {
      %c0_10 = arith.constant 0 : index
      %c0_11 = arith.constant 0 : index
      %12 = vector.load %arg10[%c0_10, %c0_11] : memref<16x128xf32, #tpu.memory_space<vmem>>, vector<16x128xf32>
      %13 = arith.mulf %12, %12 : vector<16x128xf32>
      %cst_12 = arith.constant dense<0.000000e+00> : vector<16xf32>
      %14 = vector.multi_reduction <add>, %13, %cst_12 [1] : vector<16x128xf32> to vector<16xf32>
      %15 = vector.shape_cast %14 : vector<16xf32> to vector<16x1xf32>
      %cst_13 = arith.constant 1.000000e-24 : f32
      %16 = vector.broadcast %cst_13 : f32 to vector<16x1xf32>
      %17 = arith.maximumf %15, %16 : vector<16x1xf32>
      %18 = math.rsqrt %17 : vector<16x1xf32>
      %19 = vector.broadcast %18 : vector<16x1xf32> to vector<16x128xf32>
      %20 = arith.mulf %12, %19 : vector<16x128xf32>
      %21 = arith.truncf %20 : vector<16x128xf32> to vector<16x128xbf16>
      %c0_14 = arith.constant 0 : index
      %c0_15 = arith.constant 0 : index
      %22 = vector.load %arg5[%c0_14, %c0_15] : memref<128x128xbf16, #tpu.memory_space<vmem>>, vector<128x128xbf16>
      %cst_16 = arith.constant dense<0.000000e+00> : vector<16x128xf32>
      %23 = tpu.matmul %21, %22, %cst_16 {dimension_numbers = #tpu.dot_dimension_numbers<[1], [0], [0], [1], [0, 0, 1, 1], [], []>} : vector<16x128xbf16>, vector<128x128xbf16>, vector<16x128xf32> -> vector<16x128xf32>
      %c0_17 = arith.constant 0 : index
      %c0_18 = arith.constant 0 : index
      %24 = vector.load %arg6[%c0_17, %c0_18] : memref<1x128xf32, #tpu.memory_space<vmem>>, vector<1x128xf32>
      %25 = vector.broadcast %24 : vector<1x128xf32> to vector<16x128xf32>
      %26 = arith.addf %23, %25 : vector<16x128xf32>
      %cst_19 = arith.constant 0.000000e+00 : f32
      %27 = vector.broadcast %cst_19 : f32 to vector<16x128xf32>
      %28 = arith.maximumf %26, %27 : vector<16x128xf32>
      %29 = arith.truncf %28 : vector<16x128xf32> to vector<16x128xbf16>
      %c0_20 = arith.constant 0 : index
      %c0_21 = arith.constant 0 : index
      %30 = vector.load %arg7[%c0_20, %c0_21] : memref<128x128xbf16, #tpu.memory_space<vmem>>, vector<128x128xbf16>
      %cst_22 = arith.constant dense<0.000000e+00> : vector<16x128xf32>
      %31 = tpu.matmul %29, %30, %cst_22 {dimension_numbers = #tpu.dot_dimension_numbers<[1], [0], [0], [1], [0, 0, 1, 1], [], []>} : vector<16x128xbf16>, vector<128x128xbf16>, vector<16x128xf32> -> vector<16x128xf32>
      %c0_23 = arith.constant 0 : index
      %c0_24 = arith.constant 0 : index
      %32 = vector.load %arg8[%c0_23, %c0_24] : memref<1x128xf32, #tpu.memory_space<vmem>>, vector<1x128xf32>
      %33 = vector.broadcast %32 : vector<1x128xf32> to vector<16x128xf32>
      %34 = arith.addf %31, %33 : vector<16x128xf32>
      %c0_25 = arith.constant 0 : index
      %c0_26 = arith.constant 0 : index
      %35 = vector.load %arg9[%c0_25, %c0_26] : memref<16x128xf32, #tpu.memory_space<vmem>>, vector<16x128xf32>
      tpu.vector_store %arg9[%c0_25, %c0_26], %34 {strides = array<i32>} : memref<16x128xf32, #tpu.memory_space<vmem>>, vector<16x128xf32>,
    } else {
    }
    return
  }
  func.func @transform_0(%arg0: i32, %arg1: i32) -> (i32, i32) {
    %c0_i32 = arith.constant 0 : i32
    return %arg0, %arg1 : i32, i32
  }
  func.func @transform_1(%arg0: i32, %arg1: i32) -> (i32, i32) {
    %c0_i32 = arith.constant 0 : i32
    %c0_i32_0 = arith.constant 0 : i32
    return %arg1, %c0_i32 : i32, i32
  }
  func.func @transform_2(%arg0: i32, %arg1: i32) -> (i32, i32) {
    %c0_i32 = arith.constant 0 : i32
    %c0_i32_0 = arith.constant 0 : i32
    %c0_i32_1 = arith.constant 0 : i32
    return %c0_i32, %c0_i32_0 : i32, i32
  }
  func.func @transform_3(%arg0: i32, %arg1: i32) -> (i32, i32) {
    %c0_i32 = arith.constant 0 : i32
    %c0_i32_0 = arith.constant 0 : i32
    %c0_i32_1 = arith.constant 0 : i32
    return %c0_i32, %c0_i32_0 : i32, i32
  }
  func.func @transform_4(%arg0: i32, %arg1: i32) -> (i32, i32) {
    %c0_i32 = arith.constant 0 : i32
    %c0_i32_0 = arith.constant 0 : i32
    %c0_i32_1 = arith.constant 0 : i32
    return %c0_i32, %c0_i32_0 : i32, i32
  }
  func.func @transform_5(%arg0: i32, %arg1: i32) -> (i32, i32) {
    %c0_i32 = arith.constant 0 : i32
    %c0_i32_0 = arith.constant 0 : i32
    %c0_i32_1 = arith.constant 0 : i32
    return %c0_i32, %c0_i32_0 : i32, i32
  }
  func.func @transform_6(%arg0: i32, %arg1: i32) -> (i32, i32) {
    %c0_i32 = arith.constant 0 : i32
    %c0_i32_0 = arith.constant 0 : i32
    %c0_i32_1 = arith.constant 0 : i32
    return %c0_i32, %c0_i32_0 : i32, i32
  }
  func.func @transform_7(%arg0: i32, %arg1: i32) -> (i32, i32) {
    %c0_i32 = arith.constant 0 : i32
    %c0_i32_0 = arith.constant 0 : i32
    return %arg0, %c0_i32 : i32, i32
  }
}

</mosaic_0001>

<llo_original>
// kernel: tpu_custom_call.1
$region0: #{tpu_custom_call.1}
  #allocation0 [shape = 'u32[]', space=smem, size = 0x4, offset = 0x4, fixed_abs, tag = 'smem constant byte address 0x4 - core index']
  #allocation1 [shape = 'u32[144,128]{1,0:T(1,128)}', space=vmem, size = 0x12000, scoped, tag = 'internal scratch']
  #allocation2 [shape = 'f32[16,128]{1,0:T(8,128)}', space=vmem, size = 0x2000, scoped, tag = 'scratch operand']
  %s0 = inlined_call_operand.hbm [shape: bf16[16,768], index: 0, kind: input, shape index: {}]
  %s1 = inlined_call_operand.hbm [shape: bf16[768,128], index: 1, kind: input, shape index: {}]
  %s2 = inlined_call_operand.vmem [shape: f32[1,128], index: 2, kind: input, shape index: {}]
  %s3 = inlined_call_operand.hbm [shape: bf16[128,128], index: 3, kind: input, shape index: {}]
  %s4 = inlined_call_operand.vmem [shape: f32[1,128], index: 4, kind: input, shape index: {}]
  %s5 = inlined_call_operand.hbm [shape: bf16[128,128], index: 5, kind: input, shape index: {}]
  %s6 = inlined_call_operand.vmem [shape: f32[1,128], index: 6, kind: input, shape index: {}]
  %s7 = inlined_call_operand.hbm [shape: f32[16,128], index: 7, kind: output, shape index: {}]
  %s8 = sld [smem:[#allocation0]]
  $region62: #{tpu_custom_call.1} parent=0
    _
  %s10 = ssub.s32 1, %s8
  %s11 = scalar_select 0, %s10, %s8
  $region1: #{tpu_custom_call.1} parent=0
    #allocation3 [shape = 'u8[24576]{0}', space=vmem, size = 0x6000, scoped, tag = 'input window, operand 0, single buffered']
    #allocation4 [shape = 's32[1]{0}', space=sflag, size = 0x4, scoped, tag = 'scoped memory for tpu_custom_call.1']
    #allocation5 [shape = 's32[1]{0}', space=sflag, size = 0x4, scoped, tag = 'scoped memory for tpu_custom_call.1']
    #allocation6 [shape = 'u8[196608]{0}', space=vmem, size = 0x30000, scoped, tag = 'input window, operand 1, single buffered']
    #allocation7 [shape = 's32[1]{0}', space=sflag, size = 0x4, scoped, tag = 'scoped memory for tpu_custom_call.1']
    #allocation8 [shape = 'u8[32768]{0}', space=vmem, size = 0x8000, scoped, tag = 'input window, operand 3, single buffered']
    #allocation9 [shape = 'u8[32768]{0}', space=vmem, size = 0x8000, scoped, tag = 'input window, operand 5, single buffered']
    #allocation10 [shape = 's32[1]{0}', space=sflag, size = 0x4, scoped, tag = 'scoped memory for tpu_custom_call.1']
    #allocation11 [shape = 'u8[8192]{0}', space=vmem, size = 0x2000, scoped, tag = 'output window, operand 0, single buffered']
    %12 = vsyncpa [#allocation4], 0
    %13 = vsyncpa [#allocation7], 0
    %14 = vsyncpa [#allocation10], 0
    %15 = vsyncpa [#allocation5], 0
    // Predicated region
    $region2: #{tpu_custom_call.1} parent=1 // pred_check
      _
    $region3: #{tpu_custom_call.1} parent=1 // pred_check_branch
      %17 = sbr.rel (0) target = $region5
    $region4: #{tpu_custom_call.1} parent=1 // pred_region
      %s19 = ssub.s32 768, 768
      %20 = vsyncadd [#allocation4], %s19
      %s21 = sshll.u32 [#allocation3], 4
      %s22 = int_to_ptr.vmem [resolvable:$true] %s21
      %27 = dma.hbm_to_vmem [thread:$0]  %s0, 768, %s22, [#allocation4], 384, 384, 24
    $region5: #{tpu_custom_call.1} parent=1 // pred_fallthru
      _
    // Predicated region
    $region6: #{tpu_custom_call.1} parent=1 // pred_check
      _
    $region7: #{tpu_custom_call.1} parent=1 // pred_check_branch
      %29 = sbr.rel (0) target = $region9
    $region8: #{tpu_custom_call.1} parent=1 // pred_region
      %s31 = ssub.s32 6144, 6144
      %32 = vsyncadd [#allocation7], %s31
      %s33 = sshll.u32 [#allocation6], 4
      %s34 = int_to_ptr.vmem [resolvable:$true] %s33
      %39 = dma.hbm_to_vmem [thread:$0]  %s1, 6144, %s34, [#allocation7], 64, 64, 4
    $region9: #{tpu_custom_call.1} parent=1 // pred_fallthru
      _
    // Predicated region
    $region10: #{tpu_custom_call.1} parent=1 // pred_check
      _
    $region11: #{tpu_custom_call.1} parent=1 // pred_check_branch
      %41 = sbr.rel (0) target = $region13
    $region12: #{tpu_custom_call.1} parent=1 // pred_region
      _
    $region13: #{tpu_custom_call.1} parent=1 // pred_fallthru
      _
    // Predicated region
    $region14: #{tpu_custom_call.1} parent=1 // pred_check
      _
    $region15: #{tpu_custom_call.1} parent=1 // pred_check_branch
      %43 = sbr.rel (0) target = $region17
    $region16: #{tpu_custom_call.1} parent=1 // pred_region
      %s45 = ssub.s32 1024, 1024
      %46 = vsyncadd [#allocation7], %s45
      %s47 = sshll.u32 [#allocation8], 4
      %s48 = int_to_ptr.vmem [resolvable:$true] %s47
      %53 = dma.hbm_to_vmem [thread:$0]  %s3, 1024, %s48, [#allocation7], 64, 64, 4
    $region17: #{tpu_custom_call.1} parent=1 // pred_fallthru
      _
    // Predicated region
    $region18: #{tpu_custom_call.1} parent=1 // pred_check
      _
    $region19: #{tpu_custom_call.1} parent=1 // pred_check_branch
      %55 = sbr.rel (0) target = $region21
    $region20: #{tpu_custom_call.1} parent=1 // pred_region
      _
    $region21: #{tpu_custom_call.1} parent=1 // pred_fallthru
      _
    // Predicated region
    $region22: #{tpu_custom_call.1} parent=1 // pred_check
      _
    $region23: #{tpu_custom_call.1} parent=1 // pred_check_branch
      %57 = sbr.rel (0) target = $region25
    $region24: #{tpu_custom_call.1} parent=1 // pred_region
      %s59 = ssub.s32 1024, 1024
      %60 = vsyncadd [#allocation10], %s59
      %s61 = sshll.u32 [#allocation9], 4
      %s62 = int_to_ptr.vmem [resolvable:$true] %s61
      %67 = dma.hbm_to_vmem [thread:$0]  %s5, 1024, %s62, [#allocation10], 64, 64, 4
    $region25: #{tpu_custom_call.1} parent=1 // pred_fallthru
      _
    // Predicated region
    $region26: #{tpu_custom_call.1} parent=1 // pred_check
      _
    $region27: #{tpu_custom_call.1} parent=1 // pred_check_branch
      %69 = sbr.rel (0) target = $region29
    $region28: #{tpu_custom_call.1} parent=1 // pred_region
      _
    $region29: #{tpu_custom_call.1} parent=1 // pred_fallthru
      _
    // Predicated region
    $region30: #{tpu_custom_call.1} parent=1 // pred_check
      _
    $region31: #{tpu_custom_call.1} parent=1 // pred_check_branch
      %71 = sbr.rel (0) target = $region33
    $region32: #{tpu_custom_call.1} parent=1 // pred_region
      %72 = dma.done [#allocation4], 768
    $region33: #{tpu_custom_call.1} parent=1 // pred_fallthru
      _
    // Predicated region
    $region34: #{tpu_custom_call.1} parent=1 // pred_check
      _
    $region35: #{tpu_custom_call.1} parent=1 // pred_check_branch
      %74 = sbr.rel (0) target = $region37
    $region36: #{tpu_custom_call.1} parent=1 // pred_region
      %75 = dma.done [#allocation7], 6144
    $region37: #{tpu_custom_call.1} parent=1 // pred_fallthru
      _
    // Predicated region
    $region38: #{tpu_custom_call.1} parent=1 // pred_check
      _
    $region39: #{tpu_custom_call.1} parent=1 // pred_check_branch
      %77 = sbr.rel (0) target = $region41
    $region40: #{tpu_custom_call.1} parent=1 // pred_region
      %78 = dma.done [#allocation7], 1024
    $region41: #{tpu_custom_call.1} parent=1 // pred_fallthru
      _
    // Predicated region
    $region42: #{tpu_custom_call.1} parent=1 // pred_check
      _
    $region43: #{tpu_custom_call.1} parent=1 // pred_check_branch
      %80 = sbr.rel (0) target = $region45
    $region44: #{tpu_custom_call.1} parent=1 // pred_region
      %81 = dma.done [#allocation10], 1024
    $region45: #{tpu_custom_call.1} parent=1 // pred_fallthru
      _
    %p83 = scmp.eq.s32.totalorder 0, 0
    // Predicated region
    $region46: #{tpu_custom_call.1} parent=1 // pred_check
      %p84 = pneg %p83
    $region47: #{tpu_custom_call.1} parent=1 // pred_check_branch
      %86 = sbr.rel (%p84) target = $region49
    $region48: #{tpu_custom_call.1} parent=1 // pred_region
      %v87 = vld [vmem:[%s2] sm:$0x1]
      %v89 = vlaneseq
      %v90 = vshrl.u32 %v89, 7
      %v91 = vsub.s32 0, %v90
      %v92 = vrot.slane %v87, %v91
      %94 = vst [vmem:[#allocation2] sm:$0xff] %v92
      %95 = vst [vmem:[#allocation2 + $0x8] sm:$0xff] %v92
    $region49: #{tpu_custom_call.1} parent=1 // pred_fallthru
      _
    %v96 = vld [vmem:[#allocation2] sm:$0xff]
    %v97 = vld [vmem:[#allocation2 + $0x8] sm:$0xff]
    %v98 = vld [vmem:[#allocation3] sm:$0xff]
    %v99 = vld [vmem:[#allocation3 + $0x8] sm:$0xff]
    %v100 = vld [vmem:[#allocation3 + $0x10] sm:$0xff]
    %v101 = vld [vmem:[#allocation3 + $0x18] sm:$0xff]
    %v102 = vld [vmem:[#allocation3 + $0x20] sm:$0xff]
    %v103 = vld [vmem:[#allocation3 + $0x28] sm:$0xff]
    %v104 = vld [vmem:[#allocation6] sm:$0xf]
    %v105 = vld [vmem:[#allocation6 + $0x4] sm:$0xf]
    %v106 = vld [vmem:[#allocation6 + $0x8] sm:$0xf]
    %v107 = vld [vmem:[#allocation6 + $0xc] sm:$0xf]
    %v108 = vld [vmem:[#allocation6 + $0x10] sm:$0xf]
    %v109 = vld [vmem:[#allocation6 + $0x14] sm:$0xf]
    %v110 = vld [vmem:[#allocation6 + $0x18] sm:$0xf]
    %v111 = vld [vmem:[#allocation6 + $0x1c] sm:$0xf]
    %v112 = vld [vmem:[#allocation6 + $0x20] sm:$0xf]
    %v113 = vld [vmem:[#allocation6 + $0x24] sm:$0xf]
    %v114 = vld [vmem:[#allocation6 + $0x28] sm:$0xf]
    %v115 = vld [vmem:[#allocation6 + $0x2c] sm:$0xf]
    %v116 = vld [vmem:[#allocation6 + $0x30] sm:$0xf]
    %v117 = vld [vmem:[#allocation6 + $0x34] sm:$0xf]
    %v118 = vld [vmem:[#allocation6 + $0x38] sm:$0xf]
    %v119 = vld [vmem:[#allocation6 + $0x3c] sm:$0xf]
    %v120 = vld [vmem:[#allocation6 + $0x40] sm:$0xf]
    %v121 = vld [vmem:[#allocation6 + $0x44] sm:$0xf]
    %v122 = vld [vmem:[#allocation6 + $0x48] sm:$0xf]
    %v123 = vld [vmem:[#allocation6 + $0x4c] sm:$0xf]
    %v124 = vld [vmem:[#allocation6 + $0x50] sm:$0xf]
    %v125 = vld [vmem:[#allocation6 + $0x54] sm:$0xf]
    %v126 = vld [vmem:[#allocation6 + $0x58] sm:$0xf]
    %v127 = vld [vmem:[#allocation6 + $0x5c] sm:$0xf]
    %v128 = vld [vmem:[#allocation6 + $0x60] sm:$0xf]
    %v129 = vld [vmem:[#allocation6 + $0x64] sm:$0xf]
    %v130 = vld [vmem:[#allocation6 + $0x68] sm:$0xf]
    %v131 = vld [vmem:[#allocation6 + $0x6c] sm:$0xf]
    %v132 = vld [vmem:[#allocation6 + $0x70] sm:$0xf]
    %v133 = vld [vmem:[#allocation6 + $0x74] sm:$0xf]
    %v134 = vld [vmem:[#allocation6 + $0x78] sm:$0xf]
    %v135 = vld [vmem:[#allocation6 + $0x7c] sm:$0xf]
    %v136 = vld [vmem:[#allocation6 + $0x80] sm:$0xf]
    %v137 = vld [vmem:[#allocation6 + $0x84] sm:$0xf]
    %v138 = vld [vmem:[#allocation6 + $0x88] sm:$0xf]
    %v139 = vld [vmem:[#allocation6 + $0x8c] sm:$0xf]
    %v140 = vld [vmem:[#allocation6 + $0x90] sm:$0xf]
    %v141 = vld [vmem:[#allocation6 + $0x94] sm:$0xf]
    %v142 = vld [vmem:[#allocation6 + $0x98] sm:$0xf]
    %v143 = vld [vmem:[#allocation6 + $0x9c] sm:$0xf]
    %v144 = vld [vmem:[#allocation6 + $0xa0] sm:$0xf]
    %v145 = vld [vmem:[#allocation6 + $0xa4] sm:$0xf]
    %v146 = vld [vmem:[#allocation6 + $0xa8] sm:$0xf]
    %v147 = vld [vmem:[#allocation6 + $0xac] sm:$0xf]
    %v148 = vld [vmem:[#allocation6 + $0xb0] sm:$0xf]
    %v149 = vld [vmem:[#allocation6 + $0xb4] sm:$0xf]
    %v150 = vld [vmem:[#allocation6 + $0xb8] sm:$0xf]
    %v151 = vld [vmem:[#allocation6 + $0xbc] sm:$0xf]
    %v152 = vld [vmem:[#allocation6 + $0xc0] sm:$0xf]
    %v153 = vld [vmem:[#allocation6 + $0xc4] sm:$0xf]
    %v154 = vld [vmem:[#allocation6 + $0xc8] sm:$0xf]
    %v155 = vld [vmem:[#allocation6 + $0xcc] sm:$0xf]
    %v156 = vld [vmem:[#allocation6 + $0xd0] sm:$0xf]
    %v157 = vld [vmem:[#allocation6 + $0xd4] sm:$0xf]
    %v158 = vld [vmem:[#allocation6 + $0xd8] sm:$0xf]
    %v159 = vld [vmem:[#allocation6 + $0xdc] sm:$0xf]
    %v160 = vld [vmem:[#allocation6 + $0xe0] sm:$0xf]
    %v161 = vld [vmem:[#allocation6 + $0xe4] sm:$0xf]
    %v162 = vld [vmem:[#allocation6 + $0xe8] sm:$0xf]
    %v163 = vld [vmem:[#allocation6 + $0xec] sm:$0xf]
    %v164 = vld [vmem:[#allocation6 + $0xf0] sm:$0xf]
    %v165 = vld [vmem:[#allocation6 + $0xf4] sm:$0xf]
    %v166 = vld [vmem:[#allocation6 + $0xf8] sm:$0xf]
    %v167 = vld [vmem:[#allocation6 + $0xfc] sm:$0xf]
    %v168 = vld [vmem:[#allocation6 + $0x100] sm:$0xf]
    %v169 = vld [vmem:[#allocation6 + $0x104] sm:$0xf]
    %v170 = vld [vmem:[#allocation6 + $0x108] sm:$0xf]
    %v171 = vld [vmem:[#allocation6 + $0x10c] sm:$0xf]
    %v172 = vld [vmem:[#allocation6 + $0x110] sm:$0xf]
    %v173 = vld [vmem:[#allocation6 + $0x114] sm:$0xf]
    %v174 = vld [vmem:[#allocation6 + $0x118] sm:$0xf]
    %v175 = vld [vmem:[#allocation6 + $0x11c] sm:$0xf]
    %v176 = vld [vmem:[#allocation6 + $0x120] sm:$0xf]
    %v177 = vld [vmem:[#allocation6 + $0x124] sm:$0xf]
    %v178 = vld [vmem:[#allocation6 + $0x128] sm:$0xf]
    %v179 = vld [vmem:[#allocation6 + $0x12c] sm:$0xf]
    %v180 = vld [vmem:[#allocation6 + $0x130] sm:$0xf]
    %v181 = vld [vmem:[#allocation6 + $0x134] sm:$0xf]
    %v182 = vld [vmem:[#allocation6 + $0x138] sm:$0xf]
    %v183 = vld [vmem:[#allocation6 + $0x13c] sm:$0xf]
    %v184 = vld [vmem:[#allocation6 + $0x140] sm:$0xf]
    %v185 = vld [vmem:[#allocation6 + $0x144] sm:$0xf]
    %v186 = vld [vmem:[#allocation6 + $0x148] sm:$0xf]
    %v187 = vld [vmem:[#allocation6 + $0x14c] sm:$0xf]
    %v188 = vld [vmem:[#allocation6 + $0x150] sm:$0xf]
    %v189 = vld [vmem:[#allocation6 + $0x154] sm:$0xf]
    %v190 = vld [vmem:[#allocation6 + $0x158] sm:$0xf]
    %v191 = vld [vmem:[#allocation6 + $0x15c] sm:$0xf]
    %v192 = vld [vmem:[#allocation6 + $0x160] sm:$0xf]
    %v193 = vld [vmem:[#allocation6 + $0x164] sm:$0xf]
    %v194 = vld [vmem:[#allocation6 + $0x168] sm:$0xf]
    %v195 = vld [vmem:[#allocation6 + $0x16c] sm:$0xf]
    %v196 = vld [vmem:[#allocation6 + $0x170] sm:$0xf]
    %v197 = vld [vmem:[#allocation6 + $0x174] sm:$0xf]
    %v198 = vld [vmem:[#allocation6 + $0x178] sm:$0xf]
    %v199 = vld [vmem:[#allocation6 + $0x17c] sm:$0xf]
    %v206 = vunpack.c.l.b16 %v98
    %v207 = vunpack.c.h.b16 %v98
    %v208 = vunpack.c.l.b16 %v99
    %v209 = vunpack.c.h.b16 %v99
    %v210 = vunpack.c.l.b16 %v100
    %v211 = vunpack.c.h.b16 %v100
    %v212 = vunpack.c.l.b16 %v101
    %v213 = vunpack.c.h.b16 %v101
    %v214 = vunpack.c.l.b16 %v102
    %v215 = vunpack.c.h.b16 %v102
    %v216 = vunpack.c.l.b16 %v103
    %v217 = vunpack.c.h.b16 %v103
    %v218 = vpack.c.b16 %v212, %v206
    %v219 = vpack.c.b16 %v213, %v207
    %v220 = vpack.c.b16 %v214, %v208
    %v221 = vpack.c.b16 %v215, %v209
    %v222 = vpack.c.b16 %v216, %v210
    %v223 = vpack.c.b16 %v217, %v211
    %v326 = vunpack.c.l.b16 %v104
    %v327 = vunpack.c.l.b16 %v105
    %v328 = vunpack.c.l.b16 %v106
    %v329 = vunpack.c.l.b16 %v107
    %v330 = vunpack.c.l.b16 %v108
    %v331 = vunpack.c.l.b16 %v109
    %v332 = vunpack.c.l.b16 %v110
    %v333 = vunpack.c.l.b16 %v111
    %v334 = vunpack.c.l.b16 %v112
    %v335 = vunpack.c.l.b16 %v113
    %v336 = vunpack.c.l.b16 %v114
    %v337 = vunpack.c.l.b16 %v115
    %v338 = vunpack.c.l.b16 %v116
    %v339 = vunpack.c.l.b16 %v117
    %v340 = vunpack.c.l.b16 %v118
    %v341 = vunpack.c.l.b16 %v119
    %v342 = vunpack.c.l.b16 %v120
    %v343 = vunpack.c.l.b16 %v121
    %v344 = vunpack.c.l.b16 %v122
    %v345 = vunpack.c.l.b16 %v123
    %v346 = vunpack.c.l.b16 %v124
    %v347 = vunpack.c.l.b16 %v125
    %v348 = vunpack.c.l.b16 %v126
    %v349 = vunpack.c.l.b16 %v127
    %v350 = vunpack.c.l.b16 %v128
    %v351 = vunpack.c.l.b16 %v129
    %v352 = vunpack.c.l.b16 %v130
    %v353 = vunpack.c.l.b16 %v131
    %v354 = vunpack.c.l.b16 %v132
    %v355 = vunpack.c.l.b16 %v133
    %v356 = vunpack.c.l.b16 %v134
    %v357 = vunpack.c.l.b16 %v135
    %v358 = vunpack.c.l.b16 %v136
    %v359 = vunpack.c.l.b16 %v137
    %v360 = vunpack.c.l.b16 %v138
    %v361 = vunpack.c.l.b16 %v139
    %v362 = vunpack.c.l.b16 %v140
    %v363 = vunpack.c.l.b16 %v141
    %v364 = vunpack.c.l.b16 %v142
    %v365 = vunpack.c.l.b16 %v143
    %v366 = vunpack.c.l.b16 %v144
    %v367 = vunpack.c.l.b16 %v145
    %v368 = vunpack.c.l.b16 %v146
    %v369 = vunpack.c.l.b16 %v147
    %v370 = vunpack.c.l.b16 %v148
    %v371 = vunpack.c.l.b16 %v149
    %v372 = vunpack.c.l.b16 %v150
    %v373 = vunpack.c.l.b16 %v151
    %v374 = vunpack.c.l.b16 %v152
    %v375 = vunpack.c.l.b16 %v153
    %v376 = vunpack.c.l.b16 %v154
    %v377 = vunpack.c.l.b16 %v155
    %v378 = vunpack.c.l.b16 %v156
    %v379 = vunpack.c.l.b16 %v157
    %v380 = vunpack.c.l.b16 %v158
    %v381 = vunpack.c.l.b16 %v159
    %v382 = vunpack.c.l.b16 %v160
    %v383 = vunpack.c.l.b16 %v161
    %v384 = vunpack.c.l.b16 %v162
    %v385 = vunpack.c.l.b16 %v163
    %v386 = vunpack.c.l.b16 %v164
    %v387 = vunpack.c.l.b16 %v165
    %v388 = vunpack.c.l.b16 %v166
    %v389 = vunpack.c.l.b16 %v167
    %v390 = vunpack.c.l.b16 %v168
    %v391 = vunpack.c.l.b16 %v169
    %v392 = vunpack.c.l.b16 %v170
    %v393 = vunpack.c.l.b16 %v171
    %v394 = vunpack.c.l.b16 %v172
    %v395 = vunpack.c.l.b16 %v173
    %v396 = vunpack.c.l.b16 %v174
    %v397 = vunpack.c.l.b16 %v175
    %v398 = vunpack.c.l.b16 %v176
    %v399 = vunpack.c.l.b16 %v177
    %v400 = vunpack.c.l.b16 %v178
    %v401 = vunpack.c.l.b16 %v179
    %v402 = vunpack.c.l.b16 %v180
    %v403 = vunpack.c.l.b16 %v181
    %v404 = vunpack.c.l.b16 %v182
    %v405 = vunpack.c.l.b16 %v183
    %v406 = vunpack.c.l.b16 %v184
    %v407 = vunpack.c.l.b16 %v185
    %v408 = vunpack.c.l.b16 %v186
    %v409 = vunpack.c.l.b16 %v187
    %v410 = vunpack.c.l.b16 %v188
    %v411 = vunpack.c.l.b16 %v189
    %v412 = vunpack.c.l.b16 %v190
    %v413 = vunpack.c.l.b16 %v191
    %v414 = vunpack.c.l.b16 %v192
    %v415 = vunpack.c.l.b16 %v193
    %v416 = vunpack.c.l.b16 %v194
    %v417 = vunpack.c.l.b16 %v195
    %v418 = vunpack.c.l.b16 %v196
    %v419 = vunpack.c.l.b16 %v197
    %v420 = vunpack.c.l.b16 %v198
    %v421 = vunpack.c.l.b16 %v199
    %v422 = vpack.c.b16 %v327, %v326
    %v423 = vpack.c.b16 %v329, %v328
    %v424 = vpack.c.b16 %v331, %v330
    %v425 = vpack.c.b16 %v333, %v332
    %v426 = vpack.c.b16 %v335, %v334
    %v427 = vpack.c.b16 %v337, %v336
    %v428 = vpack.c.b16 %v339, %v338
    %v429 = vpack.c.b16 %v341, %v340
    %v430 = vpack.c.b16 %v343, %v342
    %v431 = vpack.c.b16 %v345, %v344
    %v432 = vpack.c.b16 %v347, %v346
    %v433 = vpack.c.b16 %v349, %v348
    %v434 = vpack.c.b16 %v351, %v350
    %v435 = vpack.c.b16 %v353, %v352
    %v436 = vpack.c.b16 %v355, %v354
    %v437 = vpack.c.b16 %v357, %v356
    %v438 = vpack.c.b16 %v359, %v358
    %v439 = vpack.c.b16 %v361, %v360
    %v440 = vpack.c.b16 %v363, %v362
    %v441 = vpack.c.b16 %v365, %v364
    %v442 = vpack.c.b16 %v367, %v366
    %v443 = vpack.c.b16 %v369, %v368
    %v444 = vpack.c.b16 %v371, %v370
    %v445 = vpack.c.b16 %v373, %v372
    %v446 = vpack.c.b16 %v375, %v374
    %v447 = vpack.c.b16 %v377, %v376
    %v448 = vpack.c.b16 %v379, %v378
    %v449 = vpack.c.b16 %v381, %v380
    %v450 = vpack.c.b16 %v383, %v382
    %v451 = vpack.c.b16 %v385, %v384
    %v452 = vpack.c.b16 %v387, %v386
    %v453 = vpack.c.b16 %v389, %v388
    %v454 = vpack.c.b16 %v391, %v390
    %v455 = vpack.c.b16 %v393, %v392
    %v456 = vpack.c.b16 %v395, %v394
    %v457 = vpack.c.b16 %v397, %v396
    %v458 = vpack.c.b16 %v399, %v398
    %v459 = vpack.c.b16 %v401, %v400
    %v460 = vpack.c.b16 %v403, %v402
    %v461 = vpack.c.b16 %v405, %v404
    %v462 = vpack.c.b16 %v407, %v406
    %v463 = vpack.c.b16 %v409, %v408
    %v464 = vpack.c.b16 %v411, %v410
    %v465 = vpack.c.b16 %v413, %v412
    %v466 = vpack.c.b16 %v415, %v414
    %v467 = vpack.c.b16 %v417, %v416
    %v468 = vpack.c.b16 %v419, %v418
    %v469 = vpack.c.b16 %v421, %v420
    %518 = vmatprep.subr.bf16.mxu0 0
    %519 = vmatpush1.bf16.msra.mxu0 %v422
    %520 = vmatprep.subr.bf16.mxu0 0
    %521 = vmatpush1.bf16.msra.mxu0 %v423
    %522 = vmatprep.subr.bf16.mxu0 0
    %523 = vmatpush1.bf16.msra.mxu0 %v424
    %524 = vmatprep.subr.bf16.mxu0 0
    %525 = vmatpush1.bf16.msra.mxu0 %v425
    %526 = vmatprep.subr.bf16.mxu0 0
    %527 = vmatpush1.bf16.msra.mxu0 %v426
    %528 = vmatprep.subr.bf16.mxu0 0
    %529 = vmatpush1.bf16.msra.mxu0 %v427
    %530 = vmatprep.subr.bf16.mxu0 0
    %531 = vmatpush1.bf16.msra.mxu0 %v428
    %532 = vmatprep.subr.bf16.mxu0 0
    %533 = vmatpush1.bf16.msra.mxu0 %v429
    %534 = vmatprep.subr.bf16.mxu0 0
    %535 = vmatpush1.bf16.msra.mxu0 %v430
    %536 = vmatprep.subr.bf16.mxu0 0
    %537 = vmatpush1.bf16.msra.mxu0 %v431
    %538 = vmatprep.subr.bf16.mxu0 0
    %539 = vmatpush1.bf16.msra.mxu0 %v432
    %540 = vmatprep.subr.bf16.mxu0 0
    %541 = vmatpush1.bf16.msra.mxu0 %v433
    %542 = vmatprep.subr.bf16.mxu0 0
    %543 = vmatpush1.bf16.msra.mxu0 %v434
    %544 = vmatprep.subr.bf16.mxu0 0
    %545 = vmatpush1.bf16.msra.mxu0 %v435
    %546 = vmatprep.subr.bf16.mxu0 0
    %547 = vmatpush1.bf16.msra.mxu0 %v436
    %548 = vmatprep.subr.bf16.mxu0 0
    %549 = vmatpush1.bf16.msra.mxu0 %v437
    %550 = vmatprep.mubr.bf16.mxu0 %v219
    %551 = vmatmul.mubr.bf16.gmra.mrb[0].mxu0 %v218
    %v552 = vpop.f32.mrb[0].mxu0
    %v553 = vadd.f32 0.0, %v552
    %v554 = vpop.f32.mrb[0].mxu0
    %v555 = vpop.f32.mrb[0].mxu0
    %v556 = vadd.f32 0.0, %v555
    %v557 = vpop.f32.mrb[0].mxu0
    %558 = vdwg.mxu0
    %559 = vmatprep.subr.bf16.mxu0 0
    %560 = vmatpush1.bf16.msra.mxu0 %v438
    %561 = vmatprep.subr.bf16.mxu0 0
    %562 = vmatpush1.bf16.msra.mxu0 %v439
    %563 = vmatprep.subr.bf16.mxu0 0
    %564 = vmatpush1.bf16.msra.mxu0 %v440
    %565 = vmatprep.subr.bf16.mxu0 0
    %566 = vmatpush1.bf16.msra.mxu0 %v441
    %567 = vmatprep.subr.bf16.mxu0 0
    %568 = vmatpush1.bf16.msra.mxu0 %v442
    %569 = vmatprep.subr.bf16.mxu0 0
    %570 = vmatpush1.bf16.msra.mxu0 %v443
    %571 = vmatprep.subr.bf16.mxu0 0
    %572 = vmatpush1.bf16.msra.mxu0 %v444
    %573 = vmatprep.subr.bf16.mxu0 0
    %574 = vmatpush1.bf16.msra.mxu0 %v445
    %575 = vmatprep.subr.bf16.mxu0 0
    %576 = vmatpush1.bf16.msra.mxu0 %v446
    %577 = vmatprep.subr.bf16.mxu0 0
    %578 = vmatpush1.bf16.msra.mxu0 %v447
    %579 = vmatprep.subr.bf16.mxu0 0
    %580 = vmatpush1.bf16.msra.mxu0 %v448
    %581 = vmatprep.subr.bf16.mxu0 0
    %582 = vmatpush1.bf16.msra.mxu0 %v449
    %583 = vmatprep.subr.bf16.mxu0 0
    %584 = vmatpush1.bf16.msra.mxu0 %v450
    %585 = vmatprep.subr.bf16.mxu0 0
    %586 = vmatpush1.bf16.msra.mxu0 %v451
    %587 = vmatprep.subr.bf16.mxu0 0
    %588 = vmatpush1.bf16.msra.mxu0 %v452
    %589 = vmatprep.subr.bf16.mxu0 0
    %590 = vmatpush1.bf16.msra.mxu0 %v453
    %591 = vmatprep.mubr.bf16.mxu0 %v221
    %592 = vmatmul.mubr.bf16.gmra.mrb[0].mxu0 %v220
    %v593 = vpop.f32.mrb[0].mxu0
    %v594 = vadd.f32 %v553, %v593
    %v595 = vpop.f32.mrb[0].mxu0
    %v596 = vpop.f32.mrb[0].mxu0
    %v597 = vadd.f32 %v556, %v596
    %v598 = vpop.f32.mrb[0].mxu0
    %599 = vdwg.mxu0
    %600 = vmatprep.subr.bf16.mxu0 0
    %601 = vmatpush1.bf16.msra.mxu0 %v454
    %602 = vmatprep.subr.bf16.mxu0 0
    %603 = vmatpush1.bf16.msra.mxu0 %v455
    %604 = vmatprep.subr.bf16.mxu0 0
    %605 = vmatpush1.bf16.msra.mxu0 %v456
    %606 = vmatprep.subr.bf16.mxu0 0
    %607 = vmatpush1.bf16.msra.mxu0 %v457
    %608 = vmatprep.subr.bf16.mxu0 0
    %609 = vmatpush1.bf16.msra.mxu0 %v458
    %610 = vmatprep.subr.bf16.mxu0 0
    %611 = vmatpush1.bf16.msra.mxu0 %v459
    %612 = vmatprep.subr.bf16.mxu0 0
    %613 = vmatpush1.bf16.msra.mxu0 %v460
    %614 = vmatprep.subr.bf16.mxu0 0
    %615 = vmatpush1.bf16.msra.mxu0 %v461
    %616 = vmatprep.subr.bf16.mxu0 0
    %617 = vmatpush1.bf16.msra.mxu0 %v462
    %618 = vmatprep.subr.bf16.mxu0 0
    %619 = vmatpush1.bf16.msra.mxu0 %v463
    %620 = vmatprep.subr.bf16.mxu0 0
    %621 = vmatpush1.bf16.msra.mxu0 %v464
    %622 = vmatprep.subr.bf16.mxu0 0
    %623 = vmatpush1.bf16.msra.mxu0 %v465
    %624 = vmatprep.subr.bf16.mxu0 0
    %625 = vmatpush1.bf16.msra.mxu0 %v466
    %626 = vmatprep.subr.bf16.mxu0 0
    %627 = vmatpush1.bf16.msra.mxu0 %v467
    %628 = vmatprep.subr.bf16.mxu0 0
    %629 = vmatpush1.bf16.msra.mxu0 %v468
    %630 = vmatprep.subr.bf16.mxu0 0
    %631 = vmatpush1.bf16.msra.mxu0 %v469
    %632 = vmatprep.mubr.bf16.mxu0 %v223
    %633 = vmatmul.mubr.bf16.gmra.mrb[0].mxu0 %v222
    %v634 = vpop.f32.mrb[0].mxu0
    %v635 = vadd.f32 %v594, %v634
    %v636 = vpop.f32.mrb[0].mxu0
    %v637 = vpop.f32.mrb[0].mxu0
    %v638 = vadd.f32 %v597, %v637
    %v639 = vpop.f32.mrb[0].mxu0
    %640 = vdwg.mxu0
    %v641 = vadd.f32 %v96, %v635
    %v642 = vadd.f32 %v97, %v638
    %643 = vst [vmem:[#allocation2] sm:$0xff] %v641
    %644 = vst [vmem:[#allocation2 + $0x8] sm:$0xff] %v642
    // Predicated region
    $region50: #{tpu_custom_call.1} parent=1 // pred_check
      %p645 = pneg %p83
    $region51: #{tpu_custom_call.1} parent=1 // pred_check_branch
      %647 = sbr.rel (%p645) target = $region53
    $region52: #{tpu_custom_call.1} parent=1 // pred_region
      %v648 = vld [vmem:[#allocation2] sm:$0xff]
      %v649 = vld [vmem:[#allocation2 + $0x8] sm:$0xff]
      %v650 = vmul.f32 %v648, %v648
      %v651 = vmul.f32 %v649, %v649
      %652 = vadd.xlane.f32.xlu0 %v650
      %v653 = vpop.xlane.xlu0 %652
      %654 = vadd.xlane.f32.xlu0 %v651
      %v655 = vpop.xlane.xlu0 %654
      %v656 = vmax.f32 %v653, 1e-24
      %v657 = vmax.f32 %v655, 1e-24
      %v658 = vrsqrt.pop %v656
      %v659 = vrsqrt.pop %v657
      %v660 = vmul.f32 %v648, %v658
      %v661 = vmul.f32 %v649, %v659
      %v662 = vpack.c.bf16 %v661, %v660
      %v663 = vld [vmem:[#allocation8] sm:$0xf]
      %v664 = vld [vmem:[#allocation8 + $0x4] sm:$0xf]
      %v665 = vld [vmem:[#allocation8 + $0x8] sm:$0xf]
      %v666 = vld [vmem:[#allocation8 + $0xc] sm:$0xf]
      %v667 = vld [vmem:[#allocation8 + $0x10] sm:$0xf]
      %v668 = vld [vmem:[#allocation8 + $0x14] sm:$0xf]
      %v669 = vld [vmem:[#allocation8 + $0x18] sm:$0xf]
      %v670 = vld [vmem:[#allocation8 + $0x1c] sm:$0xf]
      %v671 = vld [vmem:[#allocation8 + $0x20] sm:$0xf]
      %v672 = vld [vmem:[#allocation8 + $0x24] sm:$0xf]
      %v673 = vld [vmem:[#allocation8 + $0x28] sm:$0xf]
      %v674 = vld [vmem:[#allocation8 + $0x2c] sm:$0xf]
      %v675 = vld [vmem:[#allocation8 + $0x30] sm:$0xf]
      %v676 = vld [vmem:[#allocation8 + $0x34] sm:$0xf]
      %v677 = vld [vmem:[#allocation8 + $0x38] sm:$0xf]
      %v678 = vld [vmem:[#allocation8 + $0x3c] sm:$0xf]
      %v679 = vld [vmem:[%s4] sm:$0x1]
      %v681 = vlaneseq
      %v682 = vshrl.u32 %v681, 7
      %v683 = vsub.s32 0, %v682
      %v684 = vrot.slane %v679, %v683
      %v702 = vunpack.c.l.b16 %v663
      %v703 = vunpack.c.l.b16 %v664
      %v704 = vunpack.c.l.b16 %v665
      %v705 = vunpack.c.l.b16 %v666
      %v706 = vunpack.c.l.b16 %v667
      %v707 = vunpack.c.l.b16 %v668
      %v708 = vunpack.c.l.b16 %v669
      %v709 = vunpack.c.l.b16 %v670
      %v710 = vunpack.c.l.b16 %v671
      %v711 = vunpack.c.l.b16 %v672
      %v712 = vunpack.c.l.b16 %v673
      %v713 = vunpack.c.l.b16 %v674
      %v714 = vunpack.c.l.b16 %v675
      %v715 = vunpack.c.l.b16 %v676
      %v716 = vunpack.c.l.b16 %v677
      %v717 = vunpack.c.l.b16 %v678
      %v718 = vpack.c.b16 %v703, %v702
      %v719 = vpack.c.b16 %v705, %v704
      %v720 = vpack.c.b16 %v707, %v706
      %v721 = vpack.c.b16 %v709, %v708
      %v722 = vpack.c.b16 %v711, %v710
      %v723 = vpack.c.b16 %v713, %v712
      %v724 = vpack.c.b16 %v715, %v714
      %v725 = vpack.c.b16 %v717, %v716
      %734 = vmatprep.subr.bf16.mxu0 0
      %735 = vmatpush1.bf16.msra.mxu0 %v718
      %736 = vmatprep.subr.bf16.mxu0 0
      %737 = vmatpush1.bf16.msra.mxu0 %v719
      %738 = vmatprep.subr.bf16.mxu0 0
      %739 = vmatpush1.bf16.msra.mxu0 %v720
      %740 = vmatprep.subr.bf16.mxu0 0
      %741 = vmatpush1.bf16.msra.mxu0 %v721
      %742 = vmatprep.subr.bf16.mxu0 0
      %743 = vmatpush1.bf16.msra.mxu0 %v722
      %744 = vmatprep.subr.bf16.mxu0 0
      %745 = vmatpush1.bf16.msra.mxu0 %v723
      %746 = vmatprep.subr.bf16.mxu0 0
      %747 = vmatpush1.bf16.msra.mxu0 %v724
      %748 = vmatprep.subr.bf16.mxu0 0
      %749 = vmatpush1.bf16.msra.mxu0 %v725
      %750 = vmatprep.subr.bf16.mxu0 0
      %751 = vmatpush1.bf16.msra.mxu0 0
      %752 = vmatprep.subr.bf16.mxu0 0
      %753 = vmatpush1.bf16.msra.mxu0 0
      %754 = vmatprep.subr.bf16.mxu0 0
      %755 = vmatpush1.bf16.msra.mxu0 0
      %756 = vmatprep.subr.bf16.mxu0 0
      %757 = vmatpush1.bf16.msra.mxu0 0
      %758 = vmatprep.subr.bf16.mxu0 0
      %759 = vmatpush1.bf16.msra.mxu0 0
      %760 = vmatprep.subr.bf16.mxu0 0
      %761 = vmatpush1.bf16.msra.mxu0 0
      %762 = vmatprep.subr.bf16.mxu0 0
      %763 = vmatpush1.bf16.msra.mxu0 0
      %764 = vmatprep.subr.bf16.mxu0 0
      %765 = vmatpush1.bf16.msra.mxu0 0
      %766 = vmatprep.mubr.bf16.mxu0 0
      %767 = vmatmul.mubr.bf16.gmra.mrb[0].mxu0 %v662
      %v768 = vpop.f32.mrb[0].mxu0
      %v769 = vadd.f32 %v684, %v768
      %v770 = vpop.f32.mrb[0].mxu0
      %v771 = vpop.f32.mrb[0].mxu0
      %v772 = vadd.f32 %v684, %v771
      %v773 = vpop.f32.mrb[0].mxu0
      %774 = vdwg.mxu0
      %v775 = vmax.f32 %v769, 0.0
      %v776 = vmax.f32 %v772, 0.0
      %v777 = vpack.c.bf16 %v776, %v775
      %v778 = vld [vmem:[#allocation9] sm:$0xf]
      %v779 = vld [vmem:[#allocation9 + $0x4] sm:$0xf]
      %v780 = vld [vmem:[#allocation9 + $0x8] sm:$0xf]
      %v781 = vld [vmem:[#allocation9 + $0xc] sm:$0xf]
      %v782 = vld [vmem:[#allocation9 + $0x10] sm:$0xf]
      %v783 = vld [vmem:[#allocation9 + $0x14] sm:$0xf]
      %v784 = vld [vmem:[#allocation9 + $0x18] sm:$0xf]
      %v785 = vld [vmem:[#allocation9 + $0x1c] sm:$0xf]
      %v786 = vld [vmem:[#allocation9 + $0x20] sm:$0xf]
      %v787 = vld [vmem:[#allocation9 + $0x24] sm:$0xf]
      %v788 = vld [vmem:[#allocation9 + $0x28] sm:$0xf]
      %v789 = vld [vmem:[#allocation9 + $0x2c] sm:$0xf]
      %v790 = vld [vmem:[#allocation9 + $0x30] sm:$0xf]
      %v791 = vld [vmem:[#allocation9 + $0x34] sm:$0xf]
      %v792 = vld [vmem:[#allocation9 + $0x38] sm:$0xf]
      %v793 = vld [vmem:[#allocation9 + $0x3c] sm:$0xf]
      %v794 = vld [vmem:[%s6] sm:$0x1]
      %v796 = vlaneseq
      %v797 = vshrl.u32 %v796, 7
      %v798 = vsub.s32 0, %v797
      %v799 = vrot.slane %v794, %v798
      %v817 = vunpack.c.l.b16 %v778
      %v818 = vunpack.c.l.b16 %v779
      %v819 = vunpack.c.l.b16 %v780
      %v820 = vunpack.c.l.b16 %v781
      %v821 = vunpack.c.l.b16 %v782
      %v822 = vunpack.c.l.b16 %v783
      %v823 = vunpack.c.l.b16 %v784
      %v824 = vunpack.c.l.b16 %v785
      %v825 = vunpack.c.l.b16 %v786
      %v826 = vunpack.c.l.b16 %v787
      %v827 = vunpack.c.l.b16 %v788
      %v828 = vunpack.c.l.b16 %v789
      %v829 = vunpack.c.l.b16 %v790
      %v830 = vunpack.c.l.b16 %v791
      %v831 = vunpack.c.l.b16 %v792
      %v832 = vunpack.c.l.b16 %v793
      %v833 = vpack.c.b16 %v818, %v817
      %v834 = vpack.c.b16 %v820, %v819
      %v835 = vpack.c.b16 %v822, %v821
      %v836 = vpack.c.b16 %v824, %v823
      %v837 = vpack.c.b16 %v826, %v825
      %v838 = vpack.c.b16 %v828, %v827
      %v839 = vpack.c.b16 %v830, %v829
      %v840 = vpack.c.b16 %v832, %v831
      %849 = vmatprep.subr.bf16.mxu0 0
      %850 = vmatpush1.bf16.msra.mxu0 %v833
      %851 = vmatprep.subr.bf16.mxu0 0
      %852 = vmatpush1.bf16.msra.mxu0 %v834
      %853 = vmatprep.subr.bf16.mxu0 0
      %854 = vmatpush1.bf16.msra.mxu0 %v835
      %855 = vmatprep.subr.bf16.mxu0 0
      %856 = vmatpush1.bf16.msra.mxu0 %v836
      %857 = vmatprep.subr.bf16.mxu0 0
      %858 = vmatpush1.bf16.msra.mxu0 %v837
      %859 = vmatprep.subr.bf16.mxu0 0
      %860 = vmatpush1.bf16.msra.mxu0 %v838
      %861 = vmatprep.subr.bf16.mxu0 0
      %862 = vmatpush1.bf16.msra.mxu0 %v839
      %863 = vmatprep.subr.bf16.mxu0 0
      %864 = vmatpush1.bf16.msra.mxu0 %v840
      %865 = vmatprep.subr.bf16.mxu0 0
      %866 = vmatpush1.bf16.msra.mxu0 0
      %867 = vmatprep.subr.bf16.mxu0 0
      %868 = vmatpush1.bf16.msra.mxu0 0
      %869 = vmatprep.subr.bf16.mxu0 0
      %870 = vmatpush1.bf16.msra.mxu0 0
      %871 = vmatprep.subr.bf16.mxu0 0
      %872 = vmatpush1.bf16.msra.mxu0 0
      %873 = vmatprep.subr.bf16.mxu0 0
      %874 = vmatpush1.bf16.msra.mxu0 0
      %875 = vmatprep.subr.bf16.mxu0 0
      %876 = vmatpush1.bf16.msra.mxu0 0
      %877 = vmatprep.subr.bf16.mxu0 0
      %878 = vmatpush1.bf16.msra.mxu0 0
      %879 = vmatprep.subr.bf16.mxu0 0
      %880 = vmatpush1.bf16.msra.mxu0 0
      %881 = vmatprep.mubr.bf16.mxu0 0
      %882 = vmatmul.mubr.bf16.gmra.mrb[0].mxu0 %v777
      %v883 = vpop.f32.mrb[0].mxu0
      %v884 = vadd.f32 %v799, %v883
      %v885 = vpop.f32.mrb[0].mxu0
      %v886 = vpop.f32.mrb[0].mxu0
      %v887 = vadd.f32 %v799, %v886
      %v888 = vpop.f32.mrb[0].mxu0
      %889 = vdwg.mxu0
      %890 = vst [vmem:[#allocation11] sm:$0xff] %v884
      %891 = vst [vmem:[#allocation11 + $0x8] sm:$0xff] %v887
    $region53: #{tpu_custom_call.1} parent=1 // pred_fallthru
      _
    // Predicated region
    $region54: #{tpu_custom_call.1} parent=1 // pred_check
      _
    $region55: #{tpu_custom_call.1} parent=1 // pred_check_branch
      %893 = sbr.rel (0) target = $region57
    $region56: #{tpu_custom_call.1} parent=1 // pred_region
      %s895 = ssub.s32 256, 256
      %896 = vsyncadd [#allocation5], %s895
      %s897 = sshll.u32 [#allocation11], 4
      %s898 = int_to_ptr.vmem [resolvable:$true] %s897
      %903 = dma.vmem_to_hbm [thread:$0]  %s898, 256, %s7, [#allocation5], 128, 128, 8
    $region57: #{tpu_custom_call.1} parent=1 // pred_fallthru
      _
    // Predicated region
    $region58: #{tpu_custom_call.1} parent=1 // pred_check
      _
    $region59: #{tpu_custom_call.1} parent=1 // pred_check_branch
      %905 = sbr.rel (0) target = $region61
    $region60: #{tpu_custom_call.1} parent=1 // pred_region
      %906 = dma.done [#allocation5], 256
    $region61: #{tpu_custom_call.1} parent=1 // pred_fallthru
      _
    %907 = vsyncpa [#allocation4], 1
    %908 = vsyncpa [#allocation7], 1
    %909 = vsyncpa [#allocation10], 1
    %910 = vsyncpa [#allocation5], 1

// kernel: tpu_custom_call.1
$region0: #{tpu_custom_call.1}
  #allocation0 [shape = 'u32[]', space=smem, size = 0x4, offset = 0x4, fixed_abs, tag = 'smem constant byte address 0x4 - core index']
  #allocation1 [shape = 'u32[144,128]{1,0:T(1,128)}', space=vmem, size = 0x12000, scoped, tag = 'internal scratch']
  #allocation2 [shape = 'f32[16,128]{1,0:T(8,128)}', space=vmem, size = 0x2000, scoped, tag = 'scratch operand']
  %s0 = inlined_call_operand.hbm [shape: bf16[16,768], index: 0, kind: input, shape index: {}]
  %s1 = inlined_call_operand.hbm [shape: bf16[768,128], index: 1, kind: input, shape index: {}]
  %s2 = inlined_call_operand.vmem [shape: f32[1,128], index: 2, kind: input, shape index: {}]
  %s3 = inlined_call_operand.hbm [shape: bf16[128,128], index: 3, kind: input, shape index: {}]
  %s4 = inlined_call_operand.vmem [shape: f32[1,128], index: 4, kind: input, shape index: {}]
  %s5 = inlined_call_operand.hbm [shape: bf16[128,128], index: 5, kind: input, shape index: {}]
  %s6 = inlined_call_operand.vmem [shape: f32[1,128], index: 6, kind: input, shape index: {}]
  %s7 = inlined_call_operand.hbm [shape: f32[16,128], index: 7, kind: output, shape index: {}]
  %s8 = sld [smem:[#allocation0]]
  $region62: #{tpu_custom_call.1} parent=0
    _
  %s10 = ssub.s32 1, %s8
  %s11 = scalar_select 0, %s10, %s8
  $region1: #{tpu_custom_call.1} parent=0
    #allocation3 [shape = 'u8[24576]{0}', space=vmem, size = 0x6000, scoped, tag = 'input window, operand 0, single buffered']
    #allocation4 [shape = 's32[1]{0}', space=sflag, size = 0x4, scoped, tag = 'scoped memory for tpu_custom_call.1']
    #allocation5 [shape = 's32[1]{0}', space=sflag, size = 0x4, scoped, tag = 'scoped memory for tpu_custom_call.1']
    #allocation6 [shape = 'u8[196608]{0}', space=vmem, size = 0x30000, scoped, tag = 'input window, operand 1, single buffered']
    #allocation7 [shape = 's32[1]{0}', space=sflag, size = 0x4, scoped, tag = 'scoped memory for tpu_custom_call.1']
    #allocation8 [shape = 'u8[32768]{0}', space=vmem, size = 0x8000, scoped, tag = 'input window, operand 3, single buffered']
    #allocation9 [shape = 'u8[32768]{0}', space=vmem, size = 0x8000, scoped, tag = 'input window, operand 5, single buffered']
    #allocation10 [shape = 's32[1]{0}', space=sflag, size = 0x4, scoped, tag = 'scoped memory for tpu_custom_call.1']
    #allocation11 [shape = 'u8[8192]{0}', space=vmem, size = 0x2000, scoped, tag = 'output window, operand 0, single buffered']
    %12 = vsyncpa [#allocation4], 0
    %13 = vsyncpa [#allocation7], 0
    %14 = vsyncpa [#allocation10], 0
    %15 = vsyncpa [#allocation5], 0
    // Predicated region
    $region2: #{tpu_custom_call.1} parent=1 // pred_check
      _
    $region3: #{tpu_custom_call.1} parent=1 // pred_check_branch
      %17 = sbr.rel (0) target = $region5
    $region4: #{tpu_custom_call.1} parent=1 // pred_region
      %s19 = ssub.s32 768, 768
      %20 = vsyncadd [#allocation4], %s19
      %s21 = sshll.u32 [#allocation3], 4
      %s22 = int_to_ptr.vmem [resolvable:$true] %s21
      %27 = dma.hbm_to_vmem [thread:$0]  %s0, 768, %s22, [#allocation4], 384, 384, 24
    $region5: #{tpu_custom_call.1} parent=1 // pred_fallthru
      _
    // Predicated region
    $region6: #{tpu_custom_call.1} parent=1 // pred_check
      _
    $region7: #{tpu_custom_call.1} parent=1 // pred_check_branch
      %29 = sbr.rel (0) target = $region9
    $region8: #{tpu_custom_call.1} parent=1 // pred_region
      %s31 = ssub.s32 6144, 6144
      %32 = vsyncadd [#allocation7], %s31
      %s33 = sshll.u32 [#allocation6], 4
      %s34 = int_to_ptr.vmem [resolvable:$true] %s33
      %39 = dma.hbm_to_vmem [thread:$0]  %s1, 6144, %s34, [#allocation7], 64, 64, 4
    $region9: #{tpu_custom_call.1} parent=1 // pred_fallthru
      _
    // Predicated region
    $region10: #{tpu_custom_call.1} parent=1 // pred_check
      _
    $region11: #{tpu_custom_call.1} parent=1 // pred_check_branch
      %41 = sbr.rel (0) target = $region13
    $region12: #{tpu_custom_call.1} parent=1 // pred_region
      _
    $region13: #{tpu_custom_call.1} parent=1 // pred_fallthru
      _
    // Predicated region
    $region14: #{tpu_custom_call.1} parent=1 // pred_check
      _
    $region15: #{tpu_custom_call.1} parent=1 // pred_check_branch
      %43 = sbr.rel (0) target = $region17
    $region16: #{tpu_custom_call.1} parent=1 // pred_region
      %s45 = ssub.s32 1024, 1024
      %46 = vsyncadd [#allocation7], %s45
      %s47 = sshll.u32 [#allocation8], 4
      %s48 = int_to_ptr.vmem [resolvable:$true] %s47
      %53 = dma.hbm_to_vmem [thread:$0]  %s3, 1024, %s48, [#allocation7], 64, 64, 4
    $region17: #{tpu_custom_call.1} parent=1 // pred_fallthru
      _
    // Predicated region
    $region18: #{tpu_custom_call.1} parent=1 // pred_check
      _
    $region19: #{tpu_custom_call.1} parent=1 // pred_check_branch
      %55 = sbr.rel (0) target = $region21
    $region20: #{tpu_custom_call.1} parent=1 // pred_region
      _
    $region21: #{tpu_custom_call.1} parent=1 // pred_fallthru
      _
    // Predicated region
    $region22: #{tpu_custom_call.1} parent=1 // pred_check
      _
    $region23: #{tpu_custom_call.1} parent=1 // pred_check_branch
      %57 = sbr.rel (0) target = $region25
    $region24: #{tpu_custom_call.1} parent=1 // pred_region
      %s59 = ssub.s32 1024, 1024
      %60 = vsyncadd [#allocation10], %s59
      %s61 = sshll.u32 [#allocation9], 4
      %s62 = int_to_ptr.vmem [resolvable:$true] %s61
      %67 = dma.hbm_to_vmem [thread:$0]  %s5, 1024, %s62, [#allocation10], 64, 64, 4
    $region25: #{tpu_custom_call.1} parent=1 // pred_fallthru
      _
    // Predicated region
    $region26: #{tpu_custom_call.1} parent=1 // pred_check
      _
    $region27: #{tpu_custom_call.1} parent=1 // pred_check_branch
      %69 = sbr.rel (0) target = $region29
    $region28: #{tpu_custom_call.1} parent=1 // pred_region
      _
    $region29: #{tpu_custom_call.1} parent=1 // pred_fallthru
      _
    // Predicated region
    $region30: #{tpu_custom_call.1} parent=1 // pred_check
      _
    $region31: #{tpu_custom_call.1} parent=1 // pred_check_branch
      %71 = sbr.rel (0) target = $region33
    $region32: #{tpu_custom_call.1} parent=1 // pred_region
      %72 = dma.done [#allocation4], 768
    $region33: #{tpu_custom_call.1} parent=1 // pred_fallthru
      _
    // Predicated region
    $region34: #{tpu_custom_call.1} parent=1 // pred_check
      _
    $region35: #{tpu_custom_call.1} parent=1 // pred_check_branch
      %74 = sbr.rel (0) target = $region37
    $region36: #{tpu_custom_call.1} parent=1 // pred_region
      %75 = dma.done [#allocation7], 6144
    $region37: #{tpu_custom_call.1} parent=1 // pred_fallthru
      _
    // Predicated region
    $region38: #{tpu_custom_call.1} parent=1 // pred_check
      _
    $region39: #{tpu_custom_call.1} parent=1 // pred_check_branch
      %77 = sbr.rel (0) target = $region41
    $region40: #{tpu_custom_call.1} parent=1 // pred_region
      %78 = dma.done [#allocation7], 1024
    $region41: #{tpu_custom_call.1} parent=1 // pred_fallthru
      _
    // Predicated region
    $region42: #{tpu_custom_call.1} parent=1 // pred_check
      _
    $region43: #{tpu_custom_call.1} parent=1 // pred_check_branch
      %80 = sbr.rel (0) target = $region45
    $region44: #{tpu_custom_call.1} parent=1 // pred_region
      %81 = dma.done [#allocation10], 1024
    $region45: #{tpu_custom_call.1} parent=1 // pred_fallthru
      _
    %p83 = scmp.eq.s32.totalorder 0, 0
    // Predicated region
    $region46: #{tpu_custom_call.1} parent=1 // pred_check
      %p84 = pneg %p83
    $region47: #{tpu_custom_call.1} parent=1 // pred_check_branch
      %86 = sbr.rel (%p84) target = $region49
    $region48: #{tpu_custom_call.1} parent=1 // pred_region
      %v87 = vld [vmem:[%s2] sm:$0x1]
      %v89 = vlaneseq
      %v90 = vshrl.u32 %v89, 7
      %v91 = vsub.s32 0, %v90
      %v92 = vrot.slane %v87, %v91
      %94 = vst [vmem:[#allocation2] sm:$0xff] %v92
      %95 = vst [vmem:[#allocation2 + $0x8] sm:$0xff] %v92
    $region49: #{tpu_custom_call.1} parent=1 // pred_fallthru
      _
    %v96 = vld [vmem:[#allocation2] sm:$0xff]
    %v97 = vld [vmem:[#allocation2 + $0x8] sm:$0xff]
    %v98 = vld [vmem:[#allocation3] sm:$0xff]
    %v99 = vld [vmem:[#allocation3 + $0x8] sm:$0xff]
    %v100 = vld [vmem:[#allocation3 + $0x10] sm:$0xff]
    %v101 = vld [vmem:[#allocation3 + $0x18] sm:$0xff]
    %v102 = vld [vmem:[#allocation3 + $0x20] sm:$0xff]
    %v103 = vld [vmem:[#allocation3 + $0x28] sm:$0xff]
    %v104 = vld [vmem:[#allocation6] sm:$0xf]
    %v105 = vld [vmem:[#allocation6 + $0x4] sm:$0xf]
    %v106 = vld [vmem:[#allocation6 + $0x8] sm:$0xf]
    %v107 = vld [vmem:[#allocation6 + $0xc] sm:$0xf]
    %v108 = vld [vmem:[#allocation6 + $0x10] sm:$0xf]
    %v109 = vld [vmem:[#allocation6 + $0x14] sm:$0xf]
    %v110 = vld [vmem:[#allocation6 + $0x18] sm:$0xf]
    %v111 = vld [vmem:[#allocation6 + $0x1c] sm:$0xf]
    %v112 = vld [vmem:[#allocation6 + $0x20] sm:$0xf]
    %v113 = vld [vmem:[#allocation6 + $0x24] sm:$0xf]
    %v114 = vld [vmem:[#allocation6 + $0x28] sm:$0xf]
    %v115 = vld [vmem:[#allocation6 + $0x2c] sm:$0xf]
    %v116 = vld [vmem:[#allocation6 + $0x30] sm:$0xf]
    %v117 = vld [vmem:[#allocation6 + $0x34] sm:$0xf]
    %v118 = vld [vmem:[#allocation6 + $0x38] sm:$0xf]
    %v119 = vld [vmem:[#allocation6 + $0x3c] sm:$0xf]
    %v120 = vld [vmem:[#allocation6 + $0x40] sm:$0xf]
    %v121 = vld [vmem:[#allocation6 + $0x44] sm:$0xf]
    %v122 = vld [vmem:[#allocation6 + $0x48] sm:$0xf]
    %v123 = vld [vmem:[#allocation6 + $0x4c] sm:$0xf]
    %v124 = vld [vmem:[#allocation6 + $0x50] sm:$0xf]
    %v125 = vld [vmem:[#allocation6 + $0x54] sm:$0xf]
    %v126 = vld [vmem:[#allocation6 + $0x58] sm:$0xf]
    %v127 = vld [vmem:[#allocation6 + $0x5c] sm:$0xf]
    %v128 = vld [vmem:[#allocation6 + $0x60] sm:$0xf]
    %v129 = vld [vmem:[#allocation6 + $0x64] sm:$0xf]
    %v130 = vld [vmem:[#allocation6 + $0x68] sm:$0xf]
    %v131 = vld [vmem:[#allocation6 + $0x6c] sm:$0xf]
    %v132 = vld [vmem:[#allocation6 + $0x70] sm:$0xf]
    %v133 = vld [vmem:[#allocation6 + $0x74] sm:$0xf]
    %v134 = vld [vmem:[#allocation6 + $0x78] sm:$0xf]
    %v135 = vld [vmem:[#allocation6 + $0x7c] sm:$0xf]
    %v136 = vld [vmem:[#allocation6 + $0x80] sm:$0xf]
    %v137 = vld [vmem:[#allocation6 + $0x84] sm:$0xf]
    %v138 = vld [vmem:[#allocation6 + $0x88] sm:$0xf]
    %v139 = vld [vmem:[#allocation6 + $0x8c] sm:$0xf]
    %v140 = vld [vmem:[#allocation6 + $0x90] sm:$0xf]
    %v141 = vld [vmem:[#allocation6 + $0x94] sm:$0xf]
    %v142 = vld [vmem:[#allocation6 + $0x98] sm:$0xf]
    %v143 = vld [vmem:[#allocation6 + $0x9c] sm:$0xf]
    %v144 = vld [vmem:[#allocation6 + $0xa0] sm:$0xf]
    %v145 = vld [vmem:[#allocation6 + $0xa4] sm:$0xf]
    %v146 = vld [vmem:[#allocation6 + $0xa8] sm:$0xf]
    %v147 = vld [vmem:[#allocation6 + $0xac] sm:$0xf]
    %v148 = vld [vmem:[#allocation6 + $0xb0] sm:$0xf]
    %v149 = vld [vmem:[#allocation6 + $0xb4] sm:$0xf]
    %v150 = vld [vmem:[#allocation6 + $0xb8] sm:$0xf]
    %v151 = vld [vmem:[#allocation6 + $0xbc] sm:$0xf]
    %v152 = vld [vmem:[#allocation6 + $0xc0] sm:$0xf]
    %v153 = vld [vmem:[#allocation6 + $0xc4] sm:$0xf]
    %v154 = vld [vmem:[#allocation6 + $0xc8] sm:$0xf]
    %v155 = vld [vmem:[#allocation6 + $0xcc] sm:$0xf]
    %v156 = vld [vmem:[#allocation6 + $0xd0] sm:$0xf]
    %v157 = vld [vmem:[#allocation6 + $0xd4] sm:$0xf]
    %v158 = vld [vmem:[#allocation6 + $0xd8] sm:$0xf]
    %v159 = vld [vmem:[#allocation6 + $0xdc] sm:$0xf]
    %v160 = vld [vmem:[#allocation6 + $0xe0] sm:$0xf]
    %v161 = vld [vmem:[#allocation6 + $0xe4] sm:$0xf]
    %v162 = vld [vmem:[#allocation6 + $0xe8] sm:$0xf]
    %v163 = vld [vmem:[#allocation6 + $0xec] sm:$0xf]
    %v164 = vld [vmem:[#allocation6 + $0xf0] sm:$0xf]
    %v165 = vld [vmem:[#allocation6 + $0xf4] sm:$0xf]
    %v166 = vld [vmem:[#allocation6 + $0xf8] sm:$0xf]
    %v167 = vld [vmem:[#allocation6 + $0xfc] sm:$0xf]
    %v168 = vld [vmem:[#allocation6 + $0x100] sm:$0xf]
    %v169 = vld [vmem:[#allocation6 + $0x104] sm:$0xf]
    %v170 = vld [vmem:[#allocation6 + $0x108] sm:$0xf]
    %v171 = vld [vmem:[#allocation6 + $0x10c] sm:$0xf]
    %v172 = vld [vmem:[#allocation6 + $0x110] sm:$0xf]
    %v173 = vld [vmem:[#allocation6 + $0x114] sm:$0xf]
    %v174 = vld [vmem:[#allocation6 + $0x118] sm:$0xf]
    %v175 = vld [vmem:[#allocation6 + $0x11c] sm:$0xf]
    %v176 = vld [vmem:[#allocation6 + $0x120] sm:$0xf]
    %v177 = vld [vmem:[#allocation6 + $0x124] sm:$0xf]
    %v178 = vld [vmem:[#allocation6 + $0x128] sm:$0xf]
    %v179 = vld [vmem:[#allocation6 + $0x12c] sm:$0xf]
    %v180 = vld [vmem:[#allocation6 + $0x130] sm:$0xf]
    %v181 = vld [vmem:[#allocation6 + $0x134] sm:$0xf]
    %v182 = vld [vmem:[#allocation6 + $0x138] sm:$0xf]
    %v183 = vld [vmem:[#allocation6 + $0x13c] sm:$0xf]
    %v184 = vld [vmem:[#allocation6 + $0x140] sm:$0xf]
    %v185 = vld [vmem:[#allocation6 + $0x144] sm:$0xf]
    %v186 = vld [vmem:[#allocation6 + $0x148] sm:$0xf]
    %v187 = vld [vmem:[#allocation6 + $0x14c] sm:$0xf]
    %v188 = vld [vmem:[#allocation6 + $0x150] sm:$0xf]
    %v189 = vld [vmem:[#allocation6 + $0x154] sm:$0xf]
    %v190 = vld [vmem:[#allocation6 + $0x158] sm:$0xf]
    %v191 = vld [vmem:[#allocation6 + $0x15c] sm:$0xf]
    %v192 = vld [vmem:[#allocation6 + $0x160] sm:$0xf]
    %v193 = vld [vmem:[#allocation6 + $0x164] sm:$0xf]
    %v194 = vld [vmem:[#allocation6 + $0x168] sm:$0xf]
    %v195 = vld [vmem:[#allocation6 + $0x16c] sm:$0xf]
    %v196 = vld [vmem:[#allocation6 + $0x170] sm:$0xf]
    %v197 = vld [vmem:[#allocation6 + $0x174] sm:$0xf]
    %v198 = vld [vmem:[#allocation6 + $0x178] sm:$0xf]
    %v199 = vld [vmem:[#allocation6 + $0x17c] sm:$0xf]
    %v206 = vunpack.c.l.b16 %v98
    %v207 = vunpack.c.h.b16 %v98
    %v208 = vunpack.c.l.b16 %v99
    %v209 = vunpack.c.h.b16 %v99
    %v210 = vunpack.c.l.b16 %v100
    %v211 = vunpack.c.h.b16 %v100
    %v212 = vunpack.c.l.b16 %v101
    %v213 = vunpack.c.h.b16 %v101
    %v214 = vunpack.c.l.b16 %v102
    %v215 = vunpack.c.h.b16 %v102
    %v216 = vunpack.c.l.b16 %v103
    %v217 = vunpack.c.h.b16 %v103
    %v218 = vpack.c.b16 %v212, %v206
    %v219 = vpack.c.b16 %v213, %v207
    %v220 = vpack.c.b16 %v214, %v208
    %v221 = vpack.c.b16 %v215, %v209
    %v222 = vpack.c.b16 %v216, %v210
    %v223 = vpack.c.b16 %v217, %v211
    %v326 = vunpack.c.l.b16 %v104
    %v327 = vunpack.c.l.b16 %v105
    %v328 = vunpack.c.l.b16 %v106
    %v329 = vunpack.c.l.b16 %v107
    %v330 = vunpack.c.l.b16 %v108
    %v331 = vunpack.c.l.b16 %v109
    %v332 = vunpack.c.l.b16 %v110
    %v333 = vunpack.c.l.b16 %v111
    %v334 = vunpack.c.l.b16 %v112
    %v335 = vunpack.c.l.b16 %v113
    %v336 = vunpack.c.l.b16 %v114
    %v337 = vunpack.c.l.b16 %v115
    %v338 = vunpack.c.l.b16 %v116
    %v339 = vunpack.c.l.b16 %v117
    %v340 = vunpack.c.l.b16 %v118
    %v341 = vunpack.c.l.b16 %v119
    %v342 = vunpack.c.l.b16 %v120
    %v343 = vunpack.c.l.b16 %v121
    %v344 = vunpack.c.l.b16 %v122
    %v345 = vunpack.c.l.b16 %v123
    %v346 = vunpack.c.l.b16 %v124
    %v347 = vunpack.c.l.b16 %v125
    %v348 = vunpack.c.l.b16 %v126
    %v349 = vunpack.c.l.b16 %v127
    %v350 = vunpack.c.l.b16 %v128
    %v351 = vunpack.c.l.b16 %v129
    %v352 = vunpack.c.l.b16 %v130
    %v353 = vunpack.c.l.b16 %v131
    %v354 = vunpack.c.l.b16 %v132
    %v355 = vunpack.c.l.b16 %v133
    %v356 = vunpack.c.l.b16 %v134
    %v357 = vunpack.c.l.b16 %v135
    %v358 = vunpack.c.l.b16 %v136
    %v359 = vunpack.c.l.b16 %v137
    %v360 = vunpack.c.l.b16 %v138
    %v361 = vunpack.c.l.b16 %v139
    %v362 = vunpack.c.l.b16 %v140
    %v363 = vunpack.c.l.b16 %v141
    %v364 = vunpack.c.l.b16 %v142
    %v365 = vunpack.c.l.b16 %v143
    %v366 = vunpack.c.l.b16 %v144
    %v367 = vunpack.c.l.b16 %v145
    %v368 = vunpack.c.l.b16 %v146
    %v369 = vunpack.c.l.b16 %v147
    %v370 = vunpack.c.l.b16 %v148
    %v371 = vunpack.c.l.b16 %v149
    %v372 = vunpack.c.l.b16 %v150
    %v373 = vunpack.c.l.b16 %v151
    %v374 = vunpack.c.l.b16 %v152
    %v375 = vunpack.c.l.b16 %v153
    %v376 = vunpack.c.l.b16 %v154
    %v377 = vunpack.c.l.b16 %v155
    %v378 = vunpack.c.l.b16 %v156
    %v379 = vunpack.c.l.b16 %v157
    %v380 = vunpack.c.l.b16 %v158
    %v381 = vunpack.c.l.b16 %v159
    %v382 = vunpack.c.l.b16 %v160
    %v383 = vunpack.c.l.b16 %v161
    %v384 = vunpack.c.l.b16 %v162
    %v385 = vunpack.c.l.b16 %v163
    %v386 = vunpack.c.l.b16 %v164
    %v387 = vunpack.c.l.b16 %v165
    %v388 = vunpack.c.l.b16 %v166
    %v389 = vunpack.c.l.b16 %v167
    %v390 = vunpack.c.l.b16 %v168
    %v391 = vunpack.c.l.b16 %v169
    %v392 = vunpack.c.l.b16 %v170
    %v393 = vunpack.c.l.b16 %v171
    %v394 = vunpack.c.l.b16 %v172
    %v395 = vunpack.c.l.b16 %v173
    %v396 = vunpack.c.l.b16 %v174
    %v397 = vunpack.c.l.b16 %v175
    %v398 = vunpack.c.l.b16 %v176
    %v399 = vunpack.c.l.b16 %v177
    %v400 = vunpack.c.l.b16 %v178
    %v401 = vunpack.c.l.b16 %v179
    %v402 = vunpack.c.l.b16 %v180
    %v403 = vunpack.c.l.b16 %v181
    %v404 = vunpack.c.l.b16 %v182
    %v405 = vunpack.c.l.b16 %v183
    %v406 = vunpack.c.l.b16 %v184
    %v407 = vunpack.c.l.b16 %v185
    %v408 = vunpack.c.l.b16 %v186
    %v409 = vunpack.c.l.b16 %v187
    %v410 = vunpack.c.l.b16 %v188
    %v411 = vunpack.c.l.b16 %v189
    %v412 = vunpack.c.l.b16 %v190
    %v413 = vunpack.c.l.b16 %v191
    %v414 = vunpack.c.l.b16 %v192
    %v415 = vunpack.c.l.b16 %v193
    %v416 = vunpack.c.l.b16 %v194
    %v417 = vunpack.c.l.b16 %v195
    %v418 = vunpack.c.l.b16 %v196
    %v419 = vunpack.c.l.b16 %v197
    %v420 = vunpack.c.l.b16 %v198
    %v421 = vunpack.c.l.b16 %v199
    %v422 = vpack.c.b16 %v327, %v326
    %v423 = vpack.c.b16 %v329, %v328
    %v424 = vpack.c.b16 %v331, %v330
    %v425 = vpack.c.b16 %v333, %v332
    %v426 = vpack.c.b16 %v335, %v334
    %v427 = vpack.c.b16 %v337, %v336
    %v428 = vpack.c.b16 %v339, %v338
    %v429 = vpack.c.b16 %v341, %v340
    %v430 = vpack.c.b16 %v343, %v342
    %v431 = vpack.c.b16 %v345, %v344
    %v432 = vpack.c.b16 %v347, %v346
    %v433 = vpack.c.b16 %v349, %v348
    %v434 = vpack.c.b16 %v351, %v350
    %v435 = vpack.c.b16 %v353, %v352
    %v436 = vpack.c.b16 %v355, %v354
    %v437 = vpack.c.b16 %v357, %v356
    %v438 = vpack.c.b16 %v359, %v358
    %v439 = vpack.c.b16 %v361, %v360
    %v440 = vpack.c.b16 %v363, %v362
    %v441 = vpack.c.b16 %v365, %v364
    %v442 = vpack.c.b16 %v367, %v366
    %v443 = vpack.c.b16 %v369, %v368
    %v444 = vpack.c.b16 %v371, %v370
    %v445 = vpack.c.b16 %v373, %v372
    %v446 = vpack.c.b16 %v375, %v374
    %v447 = vpack.c.b16 %v377, %v376
    %v448 = vpack.c.b16 %v379, %v378
    %v449 = vpack.c.b16 %v381, %v380
    %v450 = vpack.c.b16 %v383, %v382
    %v451 = vpack.c.b16 %v385, %v384
    %v452 = vpack.c.b16 %v387, %v386
    %v453 = vpack.c.b16 %v389, %v388
    %v454 = vpack.c.b16 %v391, %v390
    %v455 = vpack.c.b16 %v393, %v392
    %v456 = vpack.c.b16 %v395, %v394
    %v457 = vpack.c.b16 %v397, %v396
    %v458 = vpack.c.b16 %v399, %v398
    %v459 = vpack.c.b16 %v401, %v400
    %v460 = vpack.c.b16 %v403, %v402
    %v461 = vpack.c.b16 %v405, %v404
    %v462 = vpack.c.b16 %v407, %v406
    %v463 = vpack.c.b16 %v409, %v408
    %v464 = vpack.c.b16 %v411, %v410
    %v465 = vpack.c.b16 %v413, %v412
    %v466 = vpack.c.b16 %v415, %v414
    %v467 = vpack.c.b16 %v417, %v416
    %v468 = vpack.c.b16 %v419, %v418
    %v469 = vpack.c.b16 %v421, %v420
    %518 = vmatprep.subr.bf16.mxu0 0
    %519 = vmatpush1.bf16.msra.mxu0 %v422
    %520 = vmatprep.subr.bf16.mxu0 0
    %521 = vmatpush1.bf16.msra.mxu0 %v423
    %522 = vmatprep.subr.bf16.mxu0 0
    %523 = vmatpush1.bf16.msra.mxu0 %v424
    %524 = vmatprep.subr.bf16.mxu0 0
    %525 = vmatpush1.bf16.msra.mxu0 %v425
    %526 = vmatprep.subr.bf16.mxu0 0
    %527 = vmatpush1.bf16.msra.mxu0 %v426
    %528 = vmatprep.subr.bf16.mxu0 0
    %529 = vmatpush1.bf16.msra.mxu0 %v427
    %530 = vmatprep.subr.bf16.mxu0 0
    %531 = vmatpush1.bf16.msra.mxu0 %v428
    %532 = vmatprep.subr.bf16.mxu0 0
    %533 = vmatpush1.bf16.msra.mxu0 %v429
    %534 = vmatprep.subr.bf16.mxu0 0
    %535 = vmatpush1.bf16.msra.mxu0 %v430
    %536 = vmatprep.subr.bf16.mxu0 0
    %537 = vmatpush1.bf16.msra.mxu0 %v431
    %538 = vmatprep.subr.bf16.mxu0 0
    %539 = vmatpush1.bf16.msra.mxu0 %v432
    %540 = vmatprep.subr.bf16.mxu0 0
    %541 = vmatpush1.bf16.msra.mxu0 %v433
    %542 = vmatprep.subr.bf16.mxu0 0
    %543 = vmatpush1.bf16.msra.mxu0 %v434
    %544 = vmatprep.subr.bf16.mxu0 0
    %545 = vmatpush1.bf16.msra.mxu0 %v435
    %546 = vmatprep.subr.bf16.mxu0 0
    %547 = vmatpush1.bf16.msra.mxu0 %v436
    %548 = vmatprep.subr.bf16.mxu0 0
    %549 = vmatpush1.bf16.msra.mxu0 %v437
    %550 = vmatprep.mubr.bf16.mxu0 %v219
    %551 = vmatmul.mubr.bf16.gmra.mrb[0].mxu0 %v218
    %v552 = vpop.f32.mrb[0].mxu0
    %v553 = vadd.f32 0.0, %v552
    %v554 = vpop.f32.mrb[0].mxu0
    %v555 = vpop.f32.mrb[0].mxu0
    %v556 = vadd.f32 0.0, %v555
    %v557 = vpop.f32.mrb[0].mxu0
    %558 = vdwg.mxu0
    %559 = vmatprep.subr.bf16.mxu0 0
    %560 = vmatpush1.bf16.msra.mxu0 %v438
    %561 = vmatprep.subr.bf16.mxu0 0
    %562 = vmatpush1.bf16.msra.mxu0 %v439
    %563 = vmatprep.subr.bf16.mxu0 0
    %564 = vmatpush1.bf16.msra.mxu0 %v440
    %565 = vmatprep.subr.bf16.mxu0 0
    %566 = vmatpush1.bf16.msra.mxu0 %v441
    %567 = vmatprep.subr.bf16.mxu0 0
    %568 = vmatpush1.bf16.msra.mxu0 %v442
    %569 = vmatprep.subr.bf16.mxu0 0
    %570 = vmatpush1.bf16.msra.mxu0 %v443
    %571 = vmatprep.subr.bf16.mxu0 0
    %572 = vmatpush1.bf16.msra.mxu0 %v444
    %573 = vmatprep.subr.bf16.mxu0 0
    %574 = vmatpush1.bf16.msra.mxu0 %v445
    %575 = vmatprep.subr.bf16.mxu0 0
    %576 = vmatpush1.bf16.msra.mxu0 %v446
    %577 = vmatprep.subr.bf16.mxu0 0
    %578 = vmatpush1.bf16.msra.mxu0 %v447
    %579 = vmatprep.subr.bf16.mxu0 0
    %580 = vmatpush1.bf16.msra.mxu0 %v448
    %581 = vmatprep.subr.bf16.mxu0 0
    %582 = vmatpush1.bf16.msra.mxu0 %v449
    %583 = vmatprep.subr.bf16.mxu0 0
    %584 = vmatpush1.bf16.msra.mxu0 %v450
    %585 = vmatprep.subr.bf16.mxu0 0
    %586 = vmatpush1.bf16.msra.mxu0 %v451
    %587 = vmatprep.subr.bf16.mxu0 0
    %588 = vmatpush1.bf16.msra.mxu0 %v452
    %589 = vmatprep.subr.bf16.mxu0 0
    %590 = vmatpush1.bf16.msra.mxu0 %v453
    %591 = vmatprep.mubr.bf16.mxu0 %v221
    %592 = vmatmul.mubr.bf16.gmra.mrb[0].mxu0 %v220
    %v593 = vpop.f32.mrb[0].mxu0
    %v594 = vadd.f32 %v553, %v593
    %v595 = vpop.f32.mrb[0].mxu0
    %v596 = vpop.f32.mrb[0].mxu0
    %v597 = vadd.f32 %v556, %v596
    %v598 = vpop.f32.mrb[0].mxu0
    %599 = vdwg.mxu0
    %600 = vmatprep.subr.bf16.mxu0 0
    %601 = vmatpush1.bf16.msra.mxu0 %v454
    %602 = vmatprep.subr.bf16.mxu0 0
    %603 = vmatpush1.bf16.msra.mxu0 %v455
    %604 = vmatprep.subr.bf16.mxu0 0
    %605 = vmatpush1.bf16.msra.mxu0 %v456
    %606 = vmatprep.subr.bf16.mxu0 0
    %607 = vmatpush1.bf16.msra.mxu0 %v457
    %608 = vmatprep.subr.bf16.mxu0 0
    %609 = vmatpush1.bf16.msra.mxu0 %v458
    %610 = vmatprep.subr.bf16.mxu0 0
    %611 = vmatpush1.bf16.msra.mxu0 %v459
    %612 = vmatprep.subr.bf16.mxu0 0
    %613 = vmatpush1.bf16.msra.mxu0 %v460
    %614 = vmatprep.subr.bf16.mxu0 0
    %615 = vmatpush1.bf16.msra.mxu0 %v461
    %616 = vmatprep.subr.bf16.mxu0 0
    %617 = vmatpush1.bf16.msra.mxu0 %v462
    %618 = vmatprep.subr.bf16.mxu0 0
    %619 = vmatpush1.bf16.msra.mxu0 %v463
    %620 = vmatprep.subr.bf16.mxu0 0
    %621 = vmatpush1.bf16.msra.mxu0 %v464
    %622 = vmatprep.subr.bf16.mxu0 0
    %623 = vmatpush1.bf16.msra.mxu0 %v465
    %624 = vmatprep.subr.bf16.mxu0 0
    %625 = vmatpush1.bf16.msra.mxu0 %v466
    %626 = vmatprep.subr.bf16.mxu0 0
    %627 = vmatpush1.bf16.msra.mxu0 %v467
    %628 = vmatprep.subr.bf16.mxu0 0
    %629 = vmatpush1.bf16.msra.mxu0 %v468
    %630 = vmatprep.subr.bf16.mxu0 0
    %631 = vmatpush1.bf16.msra.mxu0 %v469
    %632 = vmatprep.mubr.bf16.mxu0 %v223
    %633 = vmatmul.mubr.bf16.gmra.mrb[0].mxu0 %v222
    %v634 = vpop.f32.mrb[0].mxu0
    %v635 = vadd.f32 %v594, %v634
    %v636 = vpop.f32.mrb[0].mxu0
    %v637 = vpop.f32.mrb[0].mxu0
    %v638 = vadd.f32 %v597, %v637
    %v639 = vpop.f32.mrb[0].mxu0
    %640 = vdwg.mxu0
    %v641 = vadd.f32 %v96, %v635
    %v642 = vadd.f32 %v97, %v638
    %643 = vst [vmem:[#allocation2] sm:$0xff] %v641
    %644 = vst [vmem:[#allocation2 + $0x8] sm:$0xff] %v642
    // Predicated region
    $region50: #{tpu_custom_call.1} parent=1 // pred_check
      %p645 = pneg %p83
    $region51: #{tpu_custom_call.1} parent=1 // pred_check_branch
      %647 = sbr.rel (%p645) target = $region53
    $region52: #{tpu_custom_call.1} parent=1 // pred_region
      %v648 = vld [vmem:[#allocation2] sm:$0xff]
      %v649 = vld [vmem:[#allocation2 + $0x8] sm:$0xff]
      %v650 = vmul.f32 %v648, %v648
      %v651 = vmul.f32 %v649, %v649
      %652 = vadd.xlane.f32.xlu0 %v650
      %v653 = vpop.xlane.xlu0 %652
      %654 = vadd.xlane.f32.xlu0 %v651
      %v655 = vpop.xlane.xlu0 %654
      %v656 = vmax.f32 %v653, 1e-24
      %v657 = vmax.f32 %v655, 1e-24
      %v658 = vrsqrt.pop %v656
      %v659 = vrsqrt.pop %v657
      %v660 = vmul.f32 %v648, %v658
      %v661 = vmul.f32 %v649, %v659
      %v662 = vpack.c.bf16 %v661, %v660
      %v663 = vld [vmem:[#allocation8] sm:$0xf]
      %v664 = vld [vmem:[#allocation8 + $0x4] sm:$0xf]
      %v665 = vld [vmem:[#allocation8 + $0x8] sm:$0xf]
      %v666 = vld [vmem:[#allocation8 + $0xc] sm:$0xf]
      %v667 = vld [vmem:[#allocation8 + $0x10] sm:$0xf]
      %v668 = vld [vmem:[#allocation8 + $0x14] sm:$0xf]
      %v669 = vld [vmem:[#allocation8 + $0x18] sm:$0xf]
      %v670 = vld [vmem:[#allocation8 + $0x1c] sm:$0xf]
      %v671 = vld [vmem:[#allocation8 + $0x20] sm:$0xf]
      %v672 = vld [vmem:[#allocation8 + $0x24] sm:$0xf]
      %v673 = vld [vmem:[#allocation8 + $0x28] sm:$0xf]
      %v674 = vld [vmem:[#allocation8 + $0x2c] sm:$0xf]
      %v675 = vld [vmem:[#allocation8 + $0x30] sm:$0xf]
      %v676 = vld [vmem:[#allocation8 + $0x34] sm:$0xf]
      %v677 = vld [vmem:[#allocation8 + $0x38] sm:$0xf]
      %v678 = vld [vmem:[#allocation8 + $0x3c] sm:$0xf]
      %v679 = vld [vmem:[%s4] sm:$0x1]
      %v681 = vlaneseq
      %v682 = vshrl.u32 %v681, 7
      %v683 = vsub.s32 0, %v682
      %v684 = vrot.slane %v679, %v683
      %v702 = vunpack.c.l.b16 %v663
      %v703 = vunpack.c.l.b16 %v664
      %v704 = vunpack.c.l.b16 %v665
      %v705 = vunpack.c.l.b16 %v666
      %v706 = vunpack.c.l.b16 %v667
      %v707 = vunpack.c.l.b16 %v668
      %v708 = vunpack.c.l.b16 %v669
      %v709 = vunpack.c.l.b16 %v670
      %v710 = vunpack.c.l.b16 %v671
      %v711 = vunpack.c.l.b16 %v672
      %v712 = vunpack.c.l.b16 %v673
      %v713 = vunpack.c.l.b16 %v674
      %v714 = vunpack.c.l.b16 %v675
      %v715 = vunpack.c.l.b16 %v676
      %v716 = vunpack.c.l.b16 %v677
      %v717 = vunpack.c.l.b16 %v678
      %v718 = vpack.c.b16 %v703, %v702
      %v719 = vpack.c.b16 %v705, %v704
      %v720 = vpack.c.b16 %v707, %v706
      %v721 = vpack.c.b16 %v709, %v708
      %v722 = vpack.c.b16 %v711, %v710
      %v723 = vpack.c.b16 %v713, %v712
      %v724 = vpack.c.b16 %v715, %v714
      %v725 = vpack.c.b16 %v717, %v716
      %734 = vmatprep.subr.bf16.mxu0 0
      %735 = vmatpush1.bf16.msra.mxu0 %v718
      %736 = vmatprep.subr.bf16.mxu0 0
      %737 = vmatpush1.bf16.msra.mxu0 %v719
      %738 = vmatprep.subr.bf16.mxu0 0
      %739 = vmatpush1.bf16.msra.mxu0 %v720
      %740 = vmatprep.subr.bf16.mxu0 0
      %741 = vmatpush1.bf16.msra.mxu0 %v721
      %742 = vmatprep.subr.bf16.mxu0 0
      %743 = vmatpush1.bf16.msra.mxu0 %v722
      %744 = vmatprep.subr.bf16.mxu0 0
      %745 = vmatpush1.bf16.msra.mxu0 %v723
      %746 = vmatprep.subr.bf16.mxu0 0
      %747 = vmatpush1.bf16.msra.mxu0 %v724
      %748 = vmatprep.subr.bf16.mxu0 0
      %749 = vmatpush1.bf16.msra.mxu0 %v725
      %750 = vmatprep.subr.bf16.mxu0 0
      %751 = vmatpush1.bf16.msra.mxu0 0
      %752 = vmatprep.subr.bf16.mxu0 0
      %753 = vmatpush1.bf16.msra.mxu0 0
      %754 = vmatprep.subr.bf16.mxu0 0
      %755 = vmatpush1.bf16.msra.mxu0 0
      %756 = vmatprep.subr.bf16.mxu0 0
      %757 = vmatpush1.bf16.msra.mxu0 0
      %758 = vmatprep.subr.bf16.mxu0 0
      %759 = vmatpush1.bf16.msra.mxu0 0
      %760 = vmatprep.subr.bf16.mxu0 0
      %761 = vmatpush1.bf16.msra.mxu0 0
      %762 = vmatprep.subr.bf16.mxu0 0
      %763 = vmatpush1.bf16.msra.mxu0 0
      %764 = vmatprep.subr.bf16.mxu0 0
      %765 = vmatpush1.bf16.msra.mxu0 0
      %766 = vmatprep.mubr.bf16.mxu0 0
      %767 = vmatmul.mubr.bf16.gmra.mrb[0].mxu0 %v662
      %v768 = vpop.f32.mrb[0].mxu0
      %v769 = vadd.f32 %v684, %v768
      %v770 = vpop.f32.mrb[0].mxu0
      %v771 = vpop.f32.mrb[0].mxu0
      %v772 = vadd.f32 %v684, %v771
      %v773 = vpop.f32.mrb[0].mxu0
      %774 = vdwg.mxu0
      %v775 = vmax.f32 %v769, 0.0
      %v776 = vmax.f32 %v772, 0.0
      %v777 = vpack.c.bf16 %v776, %v775
      %v778 = vld [vmem:[#allocation9] sm:$0xf]
      %v779 = vld [vmem:[#allocation9 + $0x4] sm:$0xf]
      %v780 = vld [vmem:[#allocation9 + $0x8] sm:$0xf]
      %v781 = vld [vmem:[#allocation9 + $0xc] sm:$0xf]
      %v782 = vld [vmem:[#allocation9 + $0x10] sm:$0xf]
      %v783 = vld [vmem:[#allocation9 + $0x14] sm:$0xf]
      %v784 = vld [vmem:[#allocation9 + $0x18] sm:$0xf]
      %v785 = vld [vmem:[#allocation9 + $0x1c] sm:$0xf]
      %v786 = vld [vmem:[#allocation9 + $0x20] sm:$0xf]
      %v787 = vld [vmem:[#allocation9 + $0x24] sm:$0xf]
      %v788 = vld [vmem:[#allocation9 + $0x28] sm:$0xf]
      %v789 = vld [vmem:[#allocation9 + $0x2c] sm:$0xf]
      %v790 = vld [vmem:[#allocation9 + $0x30] sm:$0xf]
      %v791 = vld [vmem:[#allocation9 + $0x34] sm:$0xf]
      %v792 = vld [vmem:[#allocation9 + $0x38] sm:$0xf]
      %v793 = vld [vmem:[#allocation9 + $0x3c] sm:$0xf]
      %v794 = vld [vmem:[%s6] sm:$0x1]
      %v796 = vlaneseq
      %v797 = vshrl.u32 %v796, 7
      %v798 = vsub.s32 0, %v797
      %v799 = vrot.slane %v794, %v798
      %v817 = vunpack.c.l.b16 %v778
      %v818 = vunpack.c.l.b16 %v779
      %v819 = vunpack.c.l.b16 %v780
      %v820 = vunpack.c.l.b16 %v781
      %v821 = vunpack.c.l.b16 %v782
      %v822 = vunpack.c.l.b16 %v783
      %v823 = vunpack.c.l.b16 %v784
      %v824 = vunpack.c.l.b16 %v785
      %v825 = vunpack.c.l.b16 %v786
      %v826 = vunpack.c.l.b16 %v787
      %v827 = vunpack.c.l.b16 %v788
      %v828 = vunpack.c.l.b16 %v789
      %v829 = vunpack.c.l.b16 %v790
      %v830 = vunpack.c.l.b16 %v791
      %v831 = vunpack.c.l.b16 %v792
      %v832 = vunpack.c.l.b16 %v793
      %v833 = vpack.c.b16 %v818, %v817
      %v834 = vpack.c.b16 %v820, %v819
      %v835 = vpack.c.b16 %v822, %v821
      %v836 = vpack.c.b16 %v824, %v823
      %v837 = vpack.c.b16 %v826, %v825
      %v838 = vpack.c.b16 %v828, %v827
      %v839 = vpack.c.b16 %v830, %v829
      %v840 = vpack.c.b16 %v832, %v831
      %849 = vmatprep.subr.bf16.mxu0 0
      %850 = vmatpush1.bf16.msra.mxu0 %v833
      %851 = vmatprep.subr.bf16.mxu0 0
      %852 = vmatpush1.bf16.msra.mxu0 %v834
      %853 = vmatprep.subr.bf16.mxu0 0
      %854 = vmatpush1.bf16.msra.mxu0 %v835
      %855 = vmatprep.subr.bf16.mxu0 0
      %856 = vmatpush1.bf16.msra.mxu0 %v836
      %857 = vmatprep.subr.bf16.mxu0 0
      %858 = vmatpush1.bf16.msra.mxu0 %v837
      %859 = vmatprep.subr.bf16.mxu0 0
      %860 = vmatpush1.bf16.msra.mxu0 %v838
      %861 = vmatprep.subr.bf16.mxu0 0
      %862 = vmatpush1.bf16.msra.mxu0 %v839
      %863 = vmatprep.subr.bf16.mxu0 0
      %864 = vmatpush1.bf16.msra.mxu0 %v840
      %865 = vmatprep.subr.bf16.mxu0 0
      %866 = vmatpush1.bf16.msra.mxu0 0
      %867 = vmatprep.subr.bf16.mxu0 0
      %868 = vmatpush1.bf16.msra.mxu0 0
      %869 = vmatprep.subr.bf16.mxu0 0
      %870 = vmatpush1.bf16.msra.mxu0 0
      %871 = vmatprep.subr.bf16.mxu0 0
      %872 = vmatpush1.bf16.msra.mxu0 0
      %873 = vmatprep.subr.bf16.mxu0 0
      %874 = vmatpush1.bf16.msra.mxu0 0
      %875 = vmatprep.subr.bf16.mxu0 0
      %876 = vmatpush1.bf16.msra.mxu0 0
      %877 = vmatprep.subr.bf16.mxu0 0
      %878 = vmatpush1.bf16.msra.mxu0 0
      %879 = vmatprep.subr.bf16.mxu0 0
      %880 = vmatpush1.bf16.msra.mxu0 0
      %881 = vmatprep.mubr.bf16.mxu0 0
      %882 = vmatmul.mubr.bf16.gmra.mrb[0].mxu0 %v777
      %v883 = vpop.f32.mrb[0].mxu0
      %v884 = vadd.f32 %v799, %v883
      %v885 = vpop.f32.mrb[0].mxu0
      %v886 = vpop.f32.mrb[0].mxu0
      %v887 = vadd.f32 %v799, %v886
      %v888 = vpop.f32.mrb[0].mxu0
      %889 = vdwg.mxu0
      %890 = vst [vmem:[#allocation11] sm:$0xff] %v884
      %891 = vst [vmem:[#allocation11 + $0x8] sm:$0xff] %v887
    $region53: #{tpu_custom_call.1} parent=1 // pred_fallthru
      _
    // Predicated region
    $region54: #{tpu_custom_call.1} parent=1 // pred_check
      _
    $region55: #{tpu_custom_call.1} parent=1 // pred_check_branch
      %893 = sbr.rel (0) target = $region57
    $region56: #{tpu_custom_call.1} parent=1 // pred_region
      %s895 = ssub.s32 256, 256
      %896 = vsyncadd [#allocation5], %s895
      %s897 = sshll.u32 [#allocation11], 4
      %s898 = int_to_ptr.vmem [resolvable:$true] %s897
      %903 = dma.vmem_to_hbm [thread:$0]  %s898, 256, %s7, [#allocation5], 128, 128, 8
    $region57: #{tpu_custom_call.1} parent=1 // pred_fallthru
      _
    // Predicated region
    $region58: #{tpu_custom_call.1} parent=1 // pred_check
      _
    $region59: #{tpu_custom_call.1} parent=1 // pred_check_branch
      %905 = sbr.rel (0) target = $region61
    $region60: #{tpu_custom_call.1} parent=1 // pred_region
      %906 = dma.done [#allocation5], 256
    $region61: #{tpu_custom_call.1} parent=1 // pred_fallthru
      _
    %907 = vsyncpa [#allocation4], 1
    %908 = vsyncpa [#allocation7], 1
    %909 = vsyncpa [#allocation10], 1
    %910 = vsyncpa [#allocation5], 1

</llo_original>
